<compile_context>
chip_gen: v7x
topology: tpu7x:2x2x1
jax: 0.10.0
libtpu: 0.0.40
codegen_flags: <defaults>
</compile_context>

<pallas_src>
import math

import jax
import jax.numpy as jnp
from jax.experimental import pallas as pl
from jax.experimental.pallas import tpu as pltpu


def _mlp_kernel(x_ref, z_ref, w_ref, b_ref, o_ref):
    # x_ref, z_ref, o_ref: (1, 1, P) point tiles (points on lanes).
    # w_ref: (4, 64, 64) packed weights; b_ref: (4, 64, 1) packed biases.
    x = x_ref[0]                           # (1, P)
    z = z_ref[0]                           # (1, P)

    # Layer 1: 2 -> 64 as VPU broadcast FMAs (outer-product style), no MXU.
    w1 = w_ref[0, 0:64, 0:2]               # (64, 2)  [out, in]
    b1 = b_ref[0, 0:64, :]                 # (64, 1)
    h = w1[:, 0:1] * x + w1[:, 1:2] * z + b1               # (64, P)
    h = jnp.maximum(h, 0.0)

    # Layer 2: 64 -> 16, MXU matmul with P lane-dense.
    w2 = w_ref[1, 0:16, 0:64]              # (16, 64)
    b2 = b_ref[1, 0:16, :]                 # (16, 1)
    h = jnp.dot(w2, h, preferred_element_type=jnp.float32) + b2   # (16, P)
    h = jnp.maximum(h, 0.0)

    # Layer 3: 16 -> 8, MXU matmul.
    w3 = w_ref[2, 0:8, 0:16]               # (8, 16)
    b3 = b_ref[2, 0:8, :]                  # (8, 1)
    h = jnp.dot(w3, h, preferred_element_type=jnp.float32) + b3   # (8, P)
    h = jnp.maximum(h, 0.0)

    # Layer 4: 8 -> 1 as a weighted sublane reduction (avoid an N=1 matmul).
    w4 = w_ref[3, 0:8, 0:1]                # (8, 1)  == W4^T
    b4 = b_ref[3, 0:1, :]                  # (1, 1)
    out = jnp.sum(w4 * h, axis=0, keepdims=True) + b4              # (1, P)

    o_ref[0] = out.astype(o_ref.dtype)


def init_params(key):
    """nn.Linear-style init (uniform +/- 1/sqrt(fan_in)), PyTorch (out, in) layout."""
    dims = [(64, 2), (16, 64), (8, 16), (1, 8)]   # (out_features, in_features)
    params = []
    for out_f, in_f in dims:
        key, kw, kb = jax.random.split(key, 3)
        bound = 1.0 / math.sqrt(in_f)
        w = jax.random.uniform(kw, (out_f, in_f), jnp.float32, -bound, bound)
        b = jax.random.uniform(kb, (out_f,), jnp.float32, -bound, bound)
        params.append((w, b))
    return params


def _pack_params(params):
    """Consolidate the 8 tiny tensors into one weight block and one bias block."""
    (w1, b1), (w2, b2), (w3, b3), (w4, b4) = params
    wp = jnp.zeros((4, 64, 64), jnp.float32)
    wp = wp.at[0, :64, :2].set(w1.astype(jnp.float32))       # (out, in)
    wp = wp.at[1, :16, :64].set(w2.astype(jnp.float32))
    wp = wp.at[2, :8, :16].set(w3.astype(jnp.float32))
    wp = wp.at[3, :8, :1].set(w4.astype(jnp.float32).T)      # stored as a column
    bp = jnp.zeros((4, 64, 1), jnp.float32)
    bp = bp.at[0, :64, 0].set(b1.astype(jnp.float32))
    bp = bp.at[1, :16, 0].set(b2.astype(jnp.float32))
    bp = bp.at[2, :8, 0].set(b3.astype(jnp.float32))
    bp = bp.at[3, :1, 0].set(b4.astype(jnp.float32))
    return wp, bp


def generator_independent_fast(x, z, params, *, max_points_per_step=4096):
    """x, z: [B, N] float32.  Returns [B, N] float32."""
    B, N = x.shape
    M = B * N

    # Points-per-step: lane-aligned (multiple of 128), large enough to amortize
    # per-step pipeline overhead, but keep >= 2 grid steps when possible so
    # both v7x TensorCores get work.
    P = min(max_points_per_step, max(128, ((pl.cdiv(M, 2) + 127) // 128) * 128))
    G = pl.cdiv(M, P)
    Mp = G * P

    xf = x.reshape(-1).astype(jnp.float32)
    zf = z.reshape(-1).astype(jnp.float32)
    if Mp != M:  # ragged tail: pad with zeros, slice off after the kernel
        xf = jnp.pad(xf, (0, Mp - M))
        zf = jnp.pad(zf, (0, Mp - M))
    xr = xf.reshape(G, 1, P)
    zr = zf.reshape(G, 1, P)

    wp, bp = _pack_params(params)

    grid_spec = pltpu.PrefetchScalarGridSpec(
        num_scalar_prefetch=0,
        grid=(G,),
        in_specs=[
            pl.BlockSpec((1, 1, P), lambda i: (i, 0, 0)),     # x points (lane-dense)
            pl.BlockSpec((1, 1, P), lambda i: (i, 0, 0)),     # z points (lane-dense)
            pl.BlockSpec((4, 64, 64), lambda i: (0, 0, 0)),   # packed weights (resident)
            pl.BlockSpec((4, 64, 1), lambda i: (0, 0, 0)),    # packed biases (resident)
        ],
        out_specs=pl.BlockSpec((1, 1, P), lambda i: (i, 0, 0)),
    )

    out = pl.pallas_call(
        _mlp_kernel,
        out_shape=jax.ShapeDtypeStruct((G, 1, P), jnp.float32),
        grid_spec=grid_spec,
        compiler_params=pltpu.CompilerParams(
            dimension_semantics=("parallel",)),
    )(xr, zr, wp, bp)

    return out.reshape(-1)[:M].reshape(B, N)


def _reference(x, z, params):
    d = jnp.stack([x, z], axis=-1)            # (B, N, 2)
    (w1, b1), (w2, b2), (w3, b3), (w4, b4) = params
    h = jnp.maximum(d @ w1.T + b1, 0.0)
    h = jnp.maximum(h @ w2.T + b2, 0.0)
    h = jnp.maximum(h @ w3.T + b3, 0.0)
    o = h @ w4.T + b4                         # (B, N, 1)
    return o[..., 0]


if __name__ == "__main__":
    key = jax.random.PRNGKey(0)
    kp, kx, kz = jax.random.split(key, 3)

    B, N = 2, 1024  # module forward implies 1024 positions per sample
    params = init_params(kp)
    x = jax.random.normal(kx, (B, N), jnp.float32)
    z = jax.random.normal(kz, (B, N), jnp.float32)

    out = generator_independent_fast(x, z, params)
    out = jax.block_until_ready(out)

    ref = _reference(x, z, params)
    assert out.shape == (B, N)
    assert jnp.allclose(out, ref, atol=2e-5, rtol=2e-5), "mismatch vs reference"

    print("KERNEL_OK")
</pallas_src>

<mosaic_0001>
module attributes {stable_mosaic.version = 11 : i64} {
  func.func @_mlp_kernel(%arg0: i32, %arg1: memref<1x1x1024xf32, #tpu.memory_space<vmem>>, %arg2: memref<1x1x1024xf32, #tpu.memory_space<vmem>>, %arg3: memref<4x64x64xf32, #tpu.memory_space<vmem>>, %arg4: memref<4x64x1xf32, #tpu.memory_space<vmem>>, %arg5: memref<1x1x1024xf32, #tpu.memory_space<vmem>>) attributes {dimension_semantics = [#tpu.dimension_semantics<parallel>], iteration_bounds = array<i64: 2>, scalar_prefetch = 0 : i64, scratch_operands = 0 : i64, tpu.core_type = #tpu.core_type<tc>, window_params = [{transform_indices = @transform_0, window_bounds = array<i64: 1, 1, 1024>}, {transform_indices = @transform_1, window_bounds = array<i64: 1, 1, 1024>}, {pipeline_mode = #tpu.pipeline_mode<synchronous>, transform_indices = @transform_2, window_bounds = array<i64: 4, 64, 64>}, {pipeline_mode = #tpu.pipeline_mode<synchronous>, transform_indices = @transform_3, window_bounds = array<i64: 4, 64, 1>}, {transform_indices = @transform_4, window_bounds = array<i64: 1, 1, 1024>}]} {
    %c0 = arith.constant 0 : index
    %c0_0 = arith.constant 0 : index
    %c0_1 = arith.constant 0 : index
    %0 = vector.load %arg1[%c0, %c0_0, %c0_1] : memref<1x1x1024xf32, #tpu.memory_space<vmem>>, vector<1x1x1024xf32>
    %1 = vector.shape_cast %0 : vector<1x1x1024xf32> to vector<1x1024xf32>
    %c0_2 = arith.constant 0 : index
    %c0_3 = arith.constant 0 : index
    %c0_4 = arith.constant 0 : index
    %2 = vector.load %arg2[%c0_2, %c0_3, %c0_4] : memref<1x1x1024xf32, #tpu.memory_space<vmem>>, vector<1x1x1024xf32>
    %3 = vector.shape_cast %2 : vector<1x1x1024xf32> to vector<1x1024xf32>
    %c0_5 = arith.constant 0 : index
    %c0_6 = arith.constant 0 : index
    %c0_7 = arith.constant 0 : index
    %4 = vector.load %arg3[%c0_5, %c0_6, %c0_7] : memref<4x64x64xf32, #tpu.memory_space<vmem>>, vector<1x64x2xf32>
    %5 = vector.shape_cast %4 : vector<1x64x2xf32> to vector<64x2xf32>
    %c0_8 = arith.constant 0 : index
    %c0_9 = arith.constant 0 : index
    %c0_10 = arith.constant 0 : index
    %6 = vector.load %arg4[%c0_8, %c0_9, %c0_10] : memref<4x64x1xf32, #tpu.memory_space<vmem>>, vector<1x64x1xf32>
    %7 = vector.shape_cast %6 : vector<1x64x1xf32> to vector<64x1xf32>
    %8 = vector.extract_strided_slice %5 {offsets = [0, 0], sizes = [64, 1], strides = [1, 1]} : vector<64x2xf32> to vector<64x1xf32>
    %9 = vector.broadcast %8 : vector<64x1xf32> to vector<64x1024xf32>
    %10 = vector.broadcast %1 : vector<1x1024xf32> to vector<64x1024xf32>
    %11 = arith.mulf %9, %10 : vector<64x1024xf32>
    %12 = vector.extract_strided_slice %5 {offsets = [0, 1], sizes = [64, 1], strides = [1, 1]} : vector<64x2xf32> to vector<64x1xf32>
    %13 = vector.broadcast %12 : vector<64x1xf32> to vector<64x1024xf32>
    %14 = vector.broadcast %3 : vector<1x1024xf32> to vector<64x1024xf32>
    %15 = arith.mulf %13, %14 : vector<64x1024xf32>
    %16 = arith.addf %11, %15 : vector<64x1024xf32>
    %17 = vector.broadcast %7 : vector<64x1xf32> to vector<64x1024xf32>
    %18 = arith.addf %16, %17 : vector<64x1024xf32>
    %cst = arith.constant 0.000000e+00 : f32
    %19 = vector.broadcast %cst : f32 to vector<64x1024xf32>
    %20 = arith.maximumf %18, %19 : vector<64x1024xf32>
    %c1 = arith.constant 1 : index
    %c0_11 = arith.constant 0 : index
    %c0_12 = arith.constant 0 : index
    %21 = vector.load %arg3[%c1, %c0_11, %c0_12] : memref<4x64x64xf32, #tpu.memory_space<vmem>>, vector<1x16x64xf32>
    %22 = vector.shape_cast %21 : vector<1x16x64xf32> to vector<16x64xf32>
    %c1_13 = arith.constant 1 : index
    %c0_14 = arith.constant 0 : index
    %c0_15 = arith.constant 0 : index
    %23 = vector.load %arg4[%c1_13, %c0_14, %c0_15] : memref<4x64x1xf32, #tpu.memory_space<vmem>>, vector<1x16x1xf32>
    %24 = vector.shape_cast %23 : vector<1x16x1xf32> to vector<16x1xf32>
    %cst_16 = arith.constant dense<0.000000e+00> : vector<16x1024xf32>
    %25 = tpu.matmul %22, %20, %cst_16 {dimension_numbers = #tpu.dot_dimension_numbers<[1], [0], [0], [1], [0, 0, 1, 1], [], []>} : vector<16x64xf32>, vector<64x1024xf32>, vector<16x1024xf32> -> vector<16x1024xf32>
    %26 = vector.broadcast %24 : vector<16x1xf32> to vector<16x1024xf32>
    %27 = arith.addf %25, %26 : vector<16x1024xf32>
    %cst_17 = arith.constant 0.000000e+00 : f32
    %28 = vector.broadcast %cst_17 : f32 to vector<16x1024xf32>
    %29 = arith.maximumf %27, %28 : vector<16x1024xf32>
    %c2 = arith.constant 2 : index
    %c0_18 = arith.constant 0 : index
    %c0_19 = arith.constant 0 : index
    %30 = vector.load %arg3[%c2, %c0_18, %c0_19] : memref<4x64x64xf32, #tpu.memory_space<vmem>>, vector<1x8x16xf32>
    %31 = vector.shape_cast %30 : vector<1x8x16xf32> to vector<8x16xf32>
    %c2_20 = arith.constant 2 : index
    %c0_21 = arith.constant 0 : index
    %c0_22 = arith.constant 0 : index
    %32 = vector.load %arg4[%c2_20, %c0_21, %c0_22] : memref<4x64x1xf32, #tpu.memory_space<vmem>>, vector<1x8x1xf32>
    %33 = vector.shape_cast %32 : vector<1x8x1xf32> to vector<8x1xf32>
    %cst_23 = arith.constant dense<0.000000e+00> : vector<8x1024xf32>
    %34 = tpu.matmul %31, %29, %cst_23 {dimension_numbers = #tpu.dot_dimension_numbers<[1], [0], [0], [1], [0, 0, 1, 1], [], []>} : vector<8x16xf32>, vector<16x1024xf32>, vector<8x1024xf32> -> vector<8x1024xf32>
    %35 = vector.broadcast %33 : vector<8x1xf32> to vector<8x1024xf32>
    %36 = arith.addf %34, %35 : vector<8x1024xf32>
    %cst_24 = arith.constant 0.000000e+00 : f32
    %37 = vector.broadcast %cst_24 : f32 to vector<8x1024xf32>
    %38 = arith.maximumf %36, %37 : vector<8x1024xf32>
    %c3 = arith.constant 3 : index
    %c0_25 = arith.constant 0 : index
    %c0_26 = arith.constant 0 : index
    %39 = vector.load %arg3[%c3, %c0_25, %c0_26] : memref<4x64x64xf32, #tpu.memory_space<vmem>>, vector<1x8x1xf32>
    %40 = vector.shape_cast %39 : vector<1x8x1xf32> to vector<8x1xf32>
    %c3_27 = arith.constant 3 : index
    %c0_28 = arith.constant 0 : index
    %c0_29 = arith.constant 0 : index
    %41 = vector.load %arg4[%c3_27, %c0_28, %c0_29] : memref<4x64x1xf32, #tpu.memory_space<vmem>>, vector<1x1x1xf32>
    %42 = vector.shape_cast %41 : vector<1x1x1xf32> to vector<1x1xf32>
    %43 = vector.broadcast %40 : vector<8x1xf32> to vector<8x1024xf32>
    %44 = arith.mulf %43, %38 : vector<8x1024xf32>
    %cst_30 = arith.constant dense<0.000000e+00> : vector<1024xf32>
    %45 = vector.multi_reduction <add>, %44, %cst_30 [0] : vector<8x1024xf32> to vector<1024xf32>
    %46 = vector.shape_cast %45 : vector<1024xf32> to vector<1x1024xf32>
    %47 = vector.broadcast %42 : vector<1x1xf32> to vector<1x1024xf32>
    %48 = arith.addf %46, %47 : vector<1x1024xf32>
    %c0_31 = arith.constant 0 : index
    %c0_32 = arith.constant 0 : index
    %c0_33 = arith.constant 0 : index
    %49 = vector.load %arg5[%c0_31, %c0_32, %c0_33] : memref<1x1x1024xf32, #tpu.memory_space<vmem>>, vector<1x1x1024xf32>
    %50 = vector.shape_cast %49 : vector<1x1x1024xf32> to vector<1x1024xf32>
    %51 = vector.shape_cast %48 : vector<1x1024xf32> to vector<1x1x1024xf32>
    tpu.vector_store %arg5[%c0_31, %c0_32, %c0_33], %51 {strides = array<i32>} : memref<1x1x1024xf32, #tpu.memory_space<vmem>>, vector<1x1x1024xf32>,
    return
  }
  func.func @transform_0(%arg0: i32) -> (i32, i32, i32) {
    %c0_i32 = arith.constant 0 : i32
    %c0_i32_0 = arith.constant 0 : i32
    %c0_i32_1 = arith.constant 0 : i32
    return %arg0, %c0_i32, %c0_i32_0 : i32, i32, i32
  }
  func.func @transform_1(%arg0: i32) -> (i32, i32, i32) {
    %c0_i32 = arith.constant 0 : i32
    %c0_i32_0 = arith.constant 0 : i32
    %c0_i32_1 = arith.constant 0 : i32
    return %arg0, %c0_i32, %c0_i32_0 : i32, i32, i32
  }
  func.func @transform_2(%arg0: i32) -> (i32, i32, i32) {
    %c0_i32 = arith.constant 0 : i32
    %c0_i32_0 = arith.constant 0 : i32
    %c0_i32_1 = arith.constant 0 : i32
    %c0_i32_2 = arith.constant 0 : i32
    return %c0_i32, %c0_i32_0, %c0_i32_1 : i32, i32, i32
  }
  func.func @transform_3(%arg0: i32) -> (i32, i32, i32) {
    %c0_i32 = arith.constant 0 : i32
    %c0_i32_0 = arith.constant 0 : i32
    %c0_i32_1 = arith.constant 0 : i32
    %c0_i32_2 = arith.constant 0 : i32
    return %c0_i32, %c0_i32_0, %c0_i32_1 : i32, i32, i32
  }
  func.func @transform_4(%arg0: i32) -> (i32, i32, i32) {
    %c0_i32 = arith.constant 0 : i32
    %c0_i32_0 = arith.constant 0 : i32
    %c0_i32_1 = arith.constant 0 : i32
    return %arg0, %c0_i32, %c0_i32_0 : i32, i32, i32
  }
}

</mosaic_0001>

<llo_original>
// kernel: tpu_custom_call.1
$region0: #{tpu_custom_call.1}
  #allocation0 [shape = 'u32[]', space=smem, size = 0x4, offset = 0x4, fixed_abs, tag = 'smem constant byte address 0x4 - core index']
  #allocation1 [shape = 'u32[144,128]{1,0:T(1,128)}', space=vmem, size = 0x12000, scoped, tag = 'internal scratch']
  %s0 = inlined_call_operand.hbm [shape: f32[2,1,1024], index: 0, kind: input, shape index: {}]
  %s1 = inlined_call_operand.hbm [shape: f32[2,1,1024], index: 1, kind: input, shape index: {}]
  %s2 = inlined_call_operand.vmem [shape: f32[4,64,64], index: 2, kind: input, shape index: {}]
  %s3 = inlined_call_operand.vmem [shape: f32[4,64,1], index: 3, kind: input, shape index: {}]
  %s4 = inlined_call_operand.hbm [shape: f32[2,1,1024], index: 4, kind: output, shape index: {}]
  %s5 = sld [smem:[#allocation0]]
  $region57: #{tpu_custom_call.1} parent=0
    _
  %s7 = ssub.s32 1, %s5
  %s8 = scalar_select 0, %s7, %s5
  $region1: #{tpu_custom_call.1} parent=0
    #allocation2 [shape = 'u8[8192]{0}', space=vmem, size = 0x2000, scoped, tag = 'input window, operand 0']
    #allocation3 [shape = 's32[2]{0}', space=sflag, size = 0x8, scoped, tag = 'scoped memory for tpu_custom_call.1']
    #allocation4 [shape = 's32[2]{0}', space=sflag, size = 0x8, scoped, tag = 'scoped memory for tpu_custom_call.1']
    #allocation5 [shape = 'u8[8192]{0}', space=vmem, size = 0x2000, scoped, tag = 'input window, operand 1']
    #allocation6 [shape = 's32[2]{0}', space=sflag, size = 0x8, scoped, tag = 'scoped memory for tpu_custom_call.1']
    #allocation7 [shape = 'u8[8192]{0}', space=vmem, size = 0x2000, scoped, tag = 'output window, operand 0']
    %9 = vsyncpa [#allocation3], 0
    %s10 = scalar_lea.sflag [#allocation3], 1
    %11 = vsyncpa %s10, 0
    %12 = vsyncpa [#allocation6], 0
    %s13 = scalar_lea.sflag [#allocation6], 1
    %14 = vsyncpa %s13, 0
    %15 = vsyncpa [#allocation4], 0
    %s16 = scalar_lea.sflag [#allocation4], 1
    %17 = vsyncpa %s16, 0
    loop: start=0, step=1, limit=4
    $region2: #{tpu_custom_call.1} parent=1 // loop_pre_header
      _
    $region3: #{tpu_custom_call.1} parent=1 // loop_header
      %s19 = sphi 0, %s23
      %p20 = scmp.ge.s32.totalorder %s19, 4
      %s29 = sphi 0, %s31
      %s32 = sphi 0, %s29
      %s33 = sphi 0, %s32
      %s49 = sphi 0, %s33
      %s55 = sphi 0, %s57
      %s58 = sphi 0, %s55
      %s59 = sphi 0, %s58
      %s75 = sphi 0, %s59
      %s79 = sphi 0, %s79
      %s81 = sphi 0, %s79
      %s82 = sphi 0, %s81
      %s96 = sphi 0, %s82
      %s100 = sphi 0, %s100
      %s102 = sphi 0, %s100
      %s103 = sphi 0, %s102
      %s117 = sphi 0, %s103
      %s123 = sphi 0, %s125
      %s126 = sphi 0, %s123
      %s127 = sphi 0, %s126
      %s143 = sphi 0, %s127
    $region4: #{tpu_custom_call.1} parent=1 // loop_header_branch
      %22 = sbr.rel (%p20) target = $region8
    $region5: #{tpu_custom_call.1} parent=1 // loop_body
      %s24 = ssub.s32 %s19, 1
      %s25 = ssub.s32 %s19, 2
      %s26 = sadd.s32 %s19, 1
      %s27 = ssub.s32 %s19, %s26
      %p28 = scmp.eq.s32.totalorder %s27, 0
      %s30 = sadd.s32 %s29, 1
      %s31 = scalar_select %p28, %s29, %s30
      %p34 = pneg %p28
      %p35 = scmp.eq.s32.totalorder %s19, 1
      %p36 = por %p34, %p35
      %p37 = scmp.ne.s32.totalorder %s29, %s32
      %p38 = scmp.eq.s32.totalorder %s19, 0
      %p39 = por %p37, %p38
      %p40 = scmp.ne.s32.totalorder %s29, %s32
      %p41 = scmp.eq.s32.totalorder %s24, 1
      %p42 = por %p40, %p41
      %p43 = scmp.ne.s32.totalorder %s32, %s33
      %p44 = scmp.eq.s32.totalorder %s24, 0
      %p45 = por %p43, %p44
      %p46 = scmp.ne.s32.totalorder %s32, %s33
      %p47 = scmp.eq.s32.totalorder %s25, 1
      %p48 = por %p46, %p47
      %p50 = scmp.ne.s32.totalorder %s33, %s49
      %p51 = scmp.eq.s32.totalorder %s25, 0
      %p52 = por %p50, %p51
      %s53 = ssub.s32 %s19, %s26
      %p54 = scmp.eq.s32.totalorder %s53, 0
      %s56 = sadd.s32 %s55, 1
      %s57 = scalar_select %p54, %s55, %s56
      %p60 = pneg %p54
      %p61 = scmp.eq.s32.totalorder %s19, 1
      %p62 = por %p60, %p61
      %p63 = scmp.ne.s32.totalorder %s55, %s58
      %p64 = scmp.eq.s32.totalorder %s19, 0
      %p65 = por %p63, %p64
      %p66 = scmp.ne.s32.totalorder %s55, %s58
      %p67 = scmp.eq.s32.totalorder %s24, 1
      %p68 = por %p66, %p67
      %p69 = scmp.ne.s32.totalorder %s58, %s59
      %p70 = scmp.eq.s32.totalorder %s24, 0
      %p71 = por %p69, %p70
      %p72 = scmp.ne.s32.totalorder %s58, %s59
      %p73 = scmp.eq.s32.totalorder %s25, 1
      %p74 = por %p72, %p73
      %p76 = scmp.ne.s32.totalorder %s59, %s75
      %p77 = scmp.eq.s32.totalorder %s25, 0
      %p78 = por %p76, %p77
      %s80 = sadd.s32 %s79, 1
      %p83 = scmp.eq.s32.totalorder %s19, 1
      %p84 = scmp.ne.s32.totalorder %s79, %s81
      %p85 = scmp.eq.s32.totalorder %s19, 0
      %p86 = por %p84, %p85
      %p87 = scmp.ne.s32.totalorder %s79, %s81
      %p88 = scmp.eq.s32.totalorder %s24, 1
      %p89 = por %p87, %p88
      %p90 = scmp.ne.s32.totalorder %s81, %s82
      %p91 = scmp.eq.s32.totalorder %s24, 0
      %p92 = por %p90, %p91
      %p93 = scmp.ne.s32.totalorder %s81, %s82
      %p94 = scmp.eq.s32.totalorder %s25, 1
      %p95 = por %p93, %p94
      %p97 = scmp.ne.s32.totalorder %s82, %s96
      %p98 = scmp.eq.s32.totalorder %s25, 0
      %p99 = por %p97, %p98
      %s101 = sadd.s32 %s100, 1
      %p104 = scmp.eq.s32.totalorder %s19, 1
      %p105 = scmp.ne.s32.totalorder %s100, %s102
      %p106 = scmp.eq.s32.totalorder %s19, 0
      %p107 = por %p105, %p106
      %p108 = scmp.ne.s32.totalorder %s100, %s102
      %p109 = scmp.eq.s32.totalorder %s24, 1
      %p110 = por %p108, %p109
      %p111 = scmp.ne.s32.totalorder %s102, %s103
      %p112 = scmp.eq.s32.totalorder %s24, 0
      %p113 = por %p111, %p112
      %p114 = scmp.ne.s32.totalorder %s102, %s103
      %p115 = scmp.eq.s32.totalorder %s25, 1
      %p116 = por %p114, %p115
      %p118 = scmp.ne.s32.totalorder %s103, %s117
      %p119 = scmp.eq.s32.totalorder %s25, 0
      %p120 = por %p118, %p119
      %s121 = ssub.s32 %s19, %s26
      %p122 = scmp.eq.s32.totalorder %s121, 0
      %s124 = sadd.s32 %s123, 1
      %s125 = scalar_select %p122, %s123, %s124
      %p128 = pneg %p122
      %p129 = scmp.eq.s32.totalorder %s19, 1
      %p130 = por %p128, %p129
      %p131 = scmp.ne.s32.totalorder %s123, %s126
      %p132 = scmp.eq.s32.totalorder %s19, 0
      %p133 = por %p131, %p132
      %p134 = scmp.ne.s32.totalorder %s123, %s126
      %p135 = scmp.eq.s32.totalorder %s24, 1
      %p136 = por %p134, %p135
      %p137 = scmp.ne.s32.totalorder %s126, %s127
      %p138 = scmp.eq.s32.totalorder %s24, 0
      %p139 = por %p137, %p138
      %p140 = scmp.ne.s32.totalorder %s126, %s127
      %p141 = scmp.eq.s32.totalorder %s25, 1
      %p142 = por %p140, %p141
      %p144 = scmp.ne.s32.totalorder %s127, %s143
      %p145 = scmp.eq.s32.totalorder %s25, 0
      %p146 = por %p144, %p145
      %p147 = scmp.le.s32.totalorder 1, %s19
      %p148 = scmp.lt.s32.totalorder %s19, 3
      %p149 = pnand %p147, %p148
      %p150 = pneg %p149
      // Predicated region
      $region9: #{tpu_custom_call.1} parent=5 // pred_check
        _
      $region10: #{tpu_custom_call.1} parent=5 // pred_check_branch
        %152 = sbr.rel (%p149) target = $region12
      $region11: #{tpu_custom_call.1} parent=5 // pred_region
        %s153 = ssub.s32 %s19, 1
        // Predicated region
        $region13: #{tpu_custom_call.1} parent=11 // pred_check
          %p154 = pneg %p92
        $region14: #{tpu_custom_call.1} parent=11 // pred_check_branch
          %156 = sbr.rel (%p154) target = $region16
        $region15: #{tpu_custom_call.1} parent=11 // pred_region
          _
        $region16: #{tpu_custom_call.1} parent=11 // pred_fallthru
          _
        // Predicated region
        $region17: #{tpu_custom_call.1} parent=11 // pred_check
          %p157 = pneg %p113
        $region18: #{tpu_custom_call.1} parent=11 // pred_check_branch
          %159 = sbr.rel (%p157) target = $region20
        $region19: #{tpu_custom_call.1} parent=11 // pred_region
          _
        $region20: #{tpu_custom_call.1} parent=11 // pred_fallthru
          _
      $region12: #{tpu_custom_call.1} parent=5 // pred_fallthru
        _
      %p160 = scmp.lt.s32.totalorder %s19, 2
      // Predicated region
      $region21: #{tpu_custom_call.1} parent=5 // pred_check
        %p161 = pneg %p160
      $region22: #{tpu_custom_call.1} parent=5 // pred_check_branch
        %163 = sbr.rel (%p161) target = $region24
      $region23: #{tpu_custom_call.1} parent=5 // pred_region
        // Predicated region
        $region25: #{tpu_custom_call.1} parent=23 // pred_check
          %p164 = pneg %p39
        $region26: #{tpu_custom_call.1} parent=23 // pred_check_branch
          %166 = sbr.rel (%p164) target = $region28
        $region27: #{tpu_custom_call.1} parent=23 // pred_region
          %s167 = sand.u32 %s29, 1
          %s168 = scalar_lea.sflag [#allocation3], %s167
          %s169 = sand.u32 %s29, 1
          %s170 = smul.addr %s169, 8
          %s171 = scalar_lea.vmem [#allocation2], %s170
          %s173 = ssub.s32 128, 128
          %174 = vsyncadd %s168, %s173
          %s175 = smul.addr %s19, 8
          %s176 = smul.addr %s175, 16
          %s177 = scalar_lea.hbm %s0, %s176
          %s179 = sshll.u32 %s171, 4
          %s180 = int_to_ptr.vmem [resolvable:$true] %s179
          %182 = dma.hbm_to_vmem [thread:$0]  %s177, 128, %s180, %s168
        $region28: #{tpu_custom_call.1} parent=23 // pred_fallthru
          _
        // Predicated region
        $region29: #{tpu_custom_call.1} parent=23 // pred_check
          %p183 = pneg %p65
        $region30: #{tpu_custom_call.1} parent=23 // pred_check_branch
          %185 = sbr.rel (%p183) target = $region32
        $region31: #{tpu_custom_call.1} parent=23 // pred_region
          %s186 = sand.u32 %s55, 1
          %s187 = scalar_lea.sflag [#allocation6], %s186
          %s188 = sand.u32 %s55, 1
          %s189 = smul.addr %s188, 8
          %s190 = scalar_lea.vmem [#allocation5], %s189
          %s192 = ssub.s32 128, 128
          %193 = vsyncadd %s187, %s192
          %s194 = smul.addr %s19, 8
          %s195 = smul.addr %s194, 16
          %s196 = scalar_lea.hbm %s1, %s195
          %s198 = sshll.u32 %s190, 4
          %s199 = int_to_ptr.vmem [resolvable:$true] %s198
          %201 = dma.hbm_to_vmem [thread:$0]  %s196, 128, %s199, %s187
        $region32: #{tpu_custom_call.1} parent=23 // pred_fallthru
          _
      $region24: #{tpu_custom_call.1} parent=5 // pred_fallthru
        _
      %p202 = scmp.le.s32.totalorder 1, %s19
      %p203 = scmp.lt.s32.totalorder %s19, 3
      %p204 = pnand %p202, %p203
      %p205 = pneg %p204
      // Predicated region
      $region33: #{tpu_custom_call.1} parent=5 // pred_check
        _
      $region34: #{tpu_custom_call.1} parent=5 // pred_check_branch
        %207 = sbr.rel (%p204) target = $region36
      $region35: #{tpu_custom_call.1} parent=5 // pred_region
        %s208 = ssub.s32 %s19, 1
        %s209 = sand.u32 %s32, 1
        %s210 = scalar_lea.sflag [#allocation3], %s209
        %s211 = sand.u32 %s32, 1
        %s212 = smul.addr %s211, 8
        %s213 = scalar_lea.vmem [#allocation2], %s212
        // Predicated region
        $region37: #{tpu_custom_call.1} parent=35 // pred_check
          %p214 = pneg %p45
        $region38: #{tpu_custom_call.1} parent=35 // pred_check_branch
          %216 = sbr.rel (%p214) target = $region40
        $region39: #{tpu_custom_call.1} parent=35 // pred_region
          %217 = dma.done %s210, 128
        $region40: #{tpu_custom_call.1} parent=35 // pred_fallthru
          _
        %s218 = sand.u32 %s58, 1
        %s219 = scalar_lea.sflag [#allocation6], %s218
        %s220 = sand.u32 %s58, 1
        %s221 = smul.addr %s220, 8
        %s222 = scalar_lea.vmem [#allocation5], %s221
        // Predicated region
        $region41: #{tpu_custom_call.1} parent=35 // pred_check
          %p223 = pneg %p71
        $region42: #{tpu_custom_call.1} parent=35 // pred_check_branch
          %225 = sbr.rel (%p223) target = $region44
        $region43: #{tpu_custom_call.1} parent=35 // pred_region
          %226 = dma.done %s219, 128
        $region44: #{tpu_custom_call.1} parent=35 // pred_fallthru
          _
        %s227 = sand.u32 %s32, 1
        %s228 = scalar_lea.sflag [#allocation3], %s227
        %s229 = sand.u32 %s32, 1
        %s230 = smul.addr %s229, 8
        %s231 = scalar_lea.vmem [#allocation2], %s230
        %p232 = pneg %p45
        %p233 = pneg %p42
        %s234 = sand.u32 %s58, 1
        %s235 = scalar_lea.sflag [#allocation6], %s234
        %s236 = sand.u32 %s58, 1
        %s237 = smul.addr %s236, 8
        %s238 = scalar_lea.vmem [#allocation5], %s237
        %p239 = pneg %p71
        %p240 = pneg %p68
        %p241 = pneg %p92
        %p242 = pneg %p89
        %p243 = pneg %p113
        %p244 = pneg %p110
        %p245 = pneg %p139
        %p246 = pneg %p136
        %s247 = sand.u32 %s126, 1
        %s248 = scalar_lea.sflag [#allocation4], %s247
        %s249 = sand.u32 %s126, 1
        %s250 = smul.addr %s249, 8
        %s251 = scalar_lea.vmem [#allocation7], %s250
        %v252 = vld [vmem:[%s213] sm:$0xff]
        %v253 = vld [vmem:[%s222] sm:$0xff]
        %v254 = vld [vmem:[%s2] sm:$0xff]
        %v255 = vld [vmem:[%s2 + $0x8] sm:$0xff]
        %v256 = vld [vmem:[%s2 + $0x10] sm:$0xff]
        %v257 = vld [vmem:[%s2 + $0x18] sm:$0xff]
        %v258 = vld [vmem:[%s2 + $0x20] sm:$0xff]
        %v259 = vld [vmem:[%s2 + $0x28] sm:$0xff]
        %v260 = vld [vmem:[%s2 + $0x30] sm:$0xff]
        %v261 = vld [vmem:[%s2 + $0x38] sm:$0xff]
        %v262 = vld [vmem:[%s3] sm:$0xff]
        %v263 = vld [vmem:[%s3 + $0x8] sm:$0xff]
        %v264 = vld [vmem:[%s3 + $0x10] sm:$0xff]
        %v265 = vld [vmem:[%s3 + $0x18] sm:$0xff]
        %v266 = vld [vmem:[%s3 + $0x20] sm:$0xff]
        %v267 = vld [vmem:[%s3 + $0x28] sm:$0xff]
        %v268 = vld [vmem:[%s3 + $0x30] sm:$0xff]
        %v269 = vld [vmem:[%s3 + $0x38] sm:$0xff]
        %271 = vset.pattern.permute.xlu0 0
        %272 = vperm.xlu0 %271, %v254
        %v273 = vpop.permute.xlu0 %272
        %276 = vset.pattern.permute.xlu0 0
        %277 = vperm.xlu0 %276, %v255
        %v278 = vpop.permute.xlu0 %277
        %281 = vset.pattern.permute.xlu0 0
        %282 = vperm.xlu0 %281, %v256
        %v283 = vpop.permute.xlu0 %282
        %286 = vset.pattern.permute.xlu0 0
        %287 = vperm.xlu0 %286, %v257
        %v288 = vpop.permute.xlu0 %287
        %291 = vset.pattern.permute.xlu0 0
        %292 = vperm.xlu0 %291, %v258
        %v293 = vpop.permute.xlu0 %292
        %296 = vset.pattern.permute.xlu0 0
        %297 = vperm.xlu0 %296, %v259
        %v298 = vpop.permute.xlu0 %297
        %301 = vset.pattern.permute.xlu0 0
        %302 = vperm.xlu0 %301, %v260
        %v303 = vpop.permute.xlu0 %302
        %306 = vset.pattern.permute.xlu0 0
        %307 = vperm.xlu0 %306, %v261
        %v308 = vpop.permute.xlu0 %307
        %v311 = vlaneseq
        %v312 = vshrl.u32 %v311, 7
        %v313 = vsub.s32 0, %v312
        %v314 = vrot.slane %v252, %v313
        %v315 = vlaneseq
        %v316 = vshrl.u32 %v315, 7
        %v317 = vsub.s32 1, %v316
        %v318 = vrot.slane %v252, %v317
        %v319 = vlaneseq
        %v320 = vshrl.u32 %v319, 7
        %v321 = vsub.s32 2, %v320
        %v322 = vrot.slane %v252, %v321
        %v323 = vlaneseq
        %v324 = vshrl.u32 %v323, 7
        %v325 = vsub.s32 3, %v324
        %v326 = vrot.slane %v252, %v325
        %v327 = vlaneseq
        %v328 = vshrl.u32 %v327, 7
        %v329 = vsub.s32 4, %v328
        %v330 = vrot.slane %v252, %v329
        %v331 = vlaneseq
        %v332 = vshrl.u32 %v331, 7
        %v333 = vsub.s32 5, %v332
        %v334 = vrot.slane %v252, %v333
        %v335 = vlaneseq
        %v336 = vshrl.u32 %v335, 7
        %v337 = vsub.s32 6, %v336
        %v338 = vrot.slane %v252, %v337
        %v339 = vlaneseq
        %v340 = vshrl.u32 %v339, 7
        %v341 = vsub.s32 7, %v340
        %v342 = vrot.slane %v252, %v341
        %v351 = vmul.f32 %v273, %v314
        %v352 = vmul.f32 %v273, %v318
        %v353 = vmul.f32 %v273, %v322
        %v354 = vmul.f32 %v273, %v326
        %v355 = vmul.f32 %v273, %v330
        %v356 = vmul.f32 %v273, %v334
        %v357 = vmul.f32 %v273, %v338
        %v358 = vmul.f32 %v273, %v342
        %v359 = vmul.f32 %v278, %v314
        %v360 = vmul.f32 %v278, %v318
        %v361 = vmul.f32 %v278, %v322
        %v362 = vmul.f32 %v278, %v326
        %v363 = vmul.f32 %v278, %v330
        %v364 = vmul.f32 %v278, %v334
        %v365 = vmul.f32 %v278, %v338
        %v366 = vmul.f32 %v278, %v342
        %v367 = vmul.f32 %v283, %v314
        %v368 = vmul.f32 %v283, %v318
        %v369 = vmul.f32 %v283, %v322
        %v370 = vmul.f32 %v283, %v326
        %v371 = vmul.f32 %v283, %v330
        %v372 = vmul.f32 %v283, %v334
        %v373 = vmul.f32 %v283, %v338
        %v374 = vmul.f32 %v283, %v342
        %v375 = vmul.f32 %v288, %v314
        %v376 = vmul.f32 %v288, %v318
        %v377 = vmul.f32 %v288, %v322
        %v378 = vmul.f32 %v288, %v326
        %v379 = vmul.f32 %v288, %v330
        %v380 = vmul.f32 %v288, %v334
        %v381 = vmul.f32 %v288, %v338
        %v382 = vmul.f32 %v288, %v342
        %v383 = vmul.f32 %v293, %v314
        %v384 = vmul.f32 %v293, %v318
        %v385 = vmul.f32 %v293, %v322
        %v386 = vmul.f32 %v293, %v326
        %v387 = vmul.f32 %v293, %v330
        %v388 = vmul.f32 %v293, %v334
        %v389 = vmul.f32 %v293, %v338
        %v390 = vmul.f32 %v293, %v342
        %v391 = vmul.f32 %v298, %v314
        %v392 = vmul.f32 %v298, %v318
        %v393 = vmul.f32 %v298, %v322
        %v394 = vmul.f32 %v298, %v326
        %v395 = vmul.f32 %v298, %v330
        %v396 = vmul.f32 %v298, %v334
        %v397 = vmul.f32 %v298, %v338
        %v398 = vmul.f32 %v298, %v342
        %v399 = vmul.f32 %v303, %v314
        %v400 = vmul.f32 %v303, %v318
        %v401 = vmul.f32 %v303, %v322
        %v402 = vmul.f32 %v303, %v326
        %v403 = vmul.f32 %v303, %v330
        %v404 = vmul.f32 %v303, %v334
        %v405 = vmul.f32 %v303, %v338
        %v406 = vmul.f32 %v303, %v342
        %v407 = vmul.f32 %v308, %v314
        %v408 = vmul.f32 %v308, %v318
        %v409 = vmul.f32 %v308, %v322
        %v410 = vmul.f32 %v308, %v326
        %v411 = vmul.f32 %v308, %v330
        %v412 = vmul.f32 %v308, %v334
        %v413 = vmul.f32 %v308, %v338
        %v414 = vmul.f32 %v308, %v342
        %415 = vset.pattern.permute.xlu0 1
        %416 = vperm.xlu0 %415, %v254
        %v417 = vpop.permute.xlu0 %416
        %419 = vset.pattern.permute.xlu0 1
        %420 = vperm.xlu0 %419, %v255
        %v421 = vpop.permute.xlu0 %420
        %423 = vset.pattern.permute.xlu0 1
        %424 = vperm.xlu0 %423, %v256
        %v425 = vpop.permute.xlu0 %424
        %427 = vset.pattern.permute.xlu0 1
        %428 = vperm.xlu0 %427, %v257
        %v429 = vpop.permute.xlu0 %428
        %431 = vset.pattern.permute.xlu0 1
        %432 = vperm.xlu0 %431, %v258
        %v433 = vpop.permute.xlu0 %432
        %435 = vset.pattern.permute.xlu0 1
        %436 = vperm.xlu0 %435, %v259
        %v437 = vpop.permute.xlu0 %436
        %439 = vset.pattern.permute.xlu0 1
        %440 = vperm.xlu0 %439, %v260
        %v441 = vpop.permute.xlu0 %440
        %443 = vset.pattern.permute.xlu0 1
        %444 = vperm.xlu0 %443, %v261
        %v445 = vpop.permute.xlu0 %444
        %v448 = vlaneseq
        %v449 = vshrl.u32 %v448, 7
        %v450 = vsub.s32 0, %v449
        %v451 = vrot.slane %v253, %v450
        %v452 = vlaneseq
        %v453 = vshrl.u32 %v452, 7
        %v454 = vsub.s32 1, %v453
        %v455 = vrot.slane %v253, %v454
        %v456 = vlaneseq
        %v457 = vshrl.u32 %v456, 7
        %v458 = vsub.s32 2, %v457
        %v459 = vrot.slane %v253, %v458
        %v460 = vlaneseq
        %v461 = vshrl.u32 %v460, 7
        %v462 = vsub.s32 3, %v461
        %v463 = vrot.slane %v253, %v462
        %v464 = vlaneseq
        %v465 = vshrl.u32 %v464, 7
        %v466 = vsub.s32 4, %v465
        %v467 = vrot.slane %v253, %v466
        %v468 = vlaneseq
        %v469 = vshrl.u32 %v468, 7
        %v470 = vsub.s32 5, %v469
        %v471 = vrot.slane %v253, %v470
        %v472 = vlaneseq
        %v473 = vshrl.u32 %v472, 7
        %v474 = vsub.s32 6, %v473
        %v475 = vrot.slane %v253, %v474
        %v476 = vlaneseq
        %v477 = vshrl.u32 %v476, 7
        %v478 = vsub.s32 7, %v477
        %v479 = vrot.slane %v253, %v478
        %v488 = vmul.f32 %v417, %v451
        %v489 = vmul.f32 %v417, %v455
        %v490 = vmul.f32 %v417, %v459
        %v491 = vmul.f32 %v417, %v463
        %v492 = vmul.f32 %v417, %v467
        %v493 = vmul.f32 %v417, %v471
        %v494 = vmul.f32 %v417, %v475
        %v495 = vmul.f32 %v417, %v479
        %v496 = vmul.f32 %v421, %v451
        %v497 = vmul.f32 %v421, %v455
        %v498 = vmul.f32 %v421, %v459
        %v499 = vmul.f32 %v421, %v463
        %v500 = vmul.f32 %v421, %v467
        %v501 = vmul.f32 %v421, %v471
        %v502 = vmul.f32 %v421, %v475
        %v503 = vmul.f32 %v421, %v479
        %v504 = vmul.f32 %v425, %v451
        %v505 = vmul.f32 %v425, %v455
        %v506 = vmul.f32 %v425, %v459
        %v507 = vmul.f32 %v425, %v463
        %v508 = vmul.f32 %v425, %v467
        %v509 = vmul.f32 %v425, %v471
        %v510 = vmul.f32 %v425, %v475
        %v511 = vmul.f32 %v425, %v479
        %v512 = vmul.f32 %v429, %v451
        %v513 = vmul.f32 %v429, %v455
        %v514 = vmul.f32 %v429, %v459
        %v515 = vmul.f32 %v429, %v463
        %v516 = vmul.f32 %v429, %v467
        %v517 = vmul.f32 %v429, %v471
        %v518 = vmul.f32 %v429, %v475
        %v519 = vmul.f32 %v429, %v479
        %v520 = vmul.f32 %v433, %v451
        %v521 = vmul.f32 %v433, %v455
        %v522 = vmul.f32 %v433, %v459
        %v523 = vmul.f32 %v433, %v463
        %v524 = vmul.f32 %v433, %v467
        %v525 = vmul.f32 %v433, %v471
        %v526 = vmul.f32 %v433, %v475
        %v527 = vmul.f32 %v433, %v479
        %v528 = vmul.f32 %v437, %v451
        %v529 = vmul.f32 %v437, %v455
        %v530 = vmul.f32 %v437, %v459
        %v531 = vmul.f32 %v437, %v463
        %v532 = vmul.f32 %v437, %v467
        %v533 = vmul.f32 %v437, %v471
        %v534 = vmul.f32 %v437, %v475
        %v535 = vmul.f32 %v437, %v479
        %v536 = vmul.f32 %v441, %v451
        %v537 = vmul.f32 %v441, %v455
        %v538 = vmul.f32 %v441, %v459
        %v539 = vmul.f32 %v441, %v463
        %v540 = vmul.f32 %v441, %v467
        %v541 = vmul.f32 %v441, %v471
        %v542 = vmul.f32 %v441, %v475
        %v543 = vmul.f32 %v441, %v479
        %v544 = vmul.f32 %v445, %v451
        %v545 = vmul.f32 %v445, %v455
        %v546 = vmul.f32 %v445, %v459
        %v547 = vmul.f32 %v445, %v463
        %v548 = vmul.f32 %v445, %v467
        %v549 = vmul.f32 %v445, %v471
        %v550 = vmul.f32 %v445, %v475
        %v551 = vmul.f32 %v445, %v479
        %v552 = vadd.f32 %v351, %v488
        %v553 = vadd.f32 %v352, %v489
        %v554 = vadd.f32 %v353, %v490
        %v555 = vadd.f32 %v354, %v491
        %v556 = vadd.f32 %v355, %v492
        %v557 = vadd.f32 %v356, %v493
        %v558 = vadd.f32 %v357, %v494
        %v559 = vadd.f32 %v358, %v495
        %v560 = vadd.f32 %v359, %v496
        %v561 = vadd.f32 %v360, %v497
        %v562 = vadd.f32 %v361, %v498
        %v563 = vadd.f32 %v362, %v499
        %v564 = vadd.f32 %v363, %v500
        %v565 = vadd.f32 %v364, %v501
        %v566 = vadd.f32 %v365, %v502
        %v567 = vadd.f32 %v366, %v503
        %v568 = vadd.f32 %v367, %v504
        %v569 = vadd.f32 %v368, %v505
        %v570 = vadd.f32 %v369, %v506
        %v571 = vadd.f32 %v370, %v507
        %v572 = vadd.f32 %v371, %v508
        %v573 = vadd.f32 %v372, %v509
        %v574 = vadd.f32 %v373, %v510
        %v575 = vadd.f32 %v374, %v511
        %v576 = vadd.f32 %v375, %v512
        %v577 = vadd.f32 %v376, %v513
        %v578 = vadd.f32 %v377, %v514
        %v579 = vadd.f32 %v378, %v515
        %v580 = vadd.f32 %v379, %v516
        %v581 = vadd.f32 %v380, %v517
        %v582 = vadd.f32 %v381, %v518
        %v583 = vadd.f32 %v382, %v519
        %v584 = vadd.f32 %v383, %v520
        %v585 = vadd.f32 %v384, %v521
        %v586 = vadd.f32 %v385, %v522
        %v587 = vadd.f32 %v386, %v523
        %v588 = vadd.f32 %v387, %v524
        %v589 = vadd.f32 %v388, %v525
        %v590 = vadd.f32 %v389, %v526
        %v591 = vadd.f32 %v390, %v527
        %v592 = vadd.f32 %v391, %v528
        %v593 = vadd.f32 %v392, %v529
        %v594 = vadd.f32 %v393, %v530
        %v595 = vadd.f32 %v394, %v531
        %v596 = vadd.f32 %v395, %v532
        %v597 = vadd.f32 %v396, %v533
        %v598 = vadd.f32 %v397, %v534
        %v599 = vadd.f32 %v398, %v535
        %v600 = vadd.f32 %v399, %v536
        %v601 = vadd.f32 %v400, %v537
        %v602 = vadd.f32 %v401, %v538
        %v603 = vadd.f32 %v402, %v539
        %v604 = vadd.f32 %v403, %v540
        %v605 = vadd.f32 %v404, %v541
        %v606 = vadd.f32 %v405, %v542
        %v607 = vadd.f32 %v406, %v543
        %v608 = vadd.f32 %v407, %v544
        %v609 = vadd.f32 %v408, %v545
        %v610 = vadd.f32 %v409, %v546
        %v611 = vadd.f32 %v410, %v547
        %v612 = vadd.f32 %v411, %v548
        %v613 = vadd.f32 %v412, %v549
        %v614 = vadd.f32 %v413, %v550
        %v615 = vadd.f32 %v414, %v551
        %617 = vset.pattern.permute.xlu0 0
        %618 = vperm.xlu0 %617, %v262
        %v619 = vpop.permute.xlu0 %618
        %622 = vset.pattern.permute.xlu0 0
        %623 = vperm.xlu0 %622, %v263
        %v624 = vpop.permute.xlu0 %623
        %627 = vset.pattern.permute.xlu0 0
        %628 = vperm.xlu0 %627, %v264
        %v629 = vpop.permute.xlu0 %628
        %632 = vset.pattern.permute.xlu0 0
        %633 = vperm.xlu0 %632, %v265
        %v634 = vpop.permute.xlu0 %633
        %637 = vset.pattern.permute.xlu0 0
        %638 = vperm.xlu0 %637, %v266
        %v639 = vpop.permute.xlu0 %638
        %642 = vset.pattern.permute.xlu0 0
        %643 = vperm.xlu0 %642, %v267
        %v644 = vpop.permute.xlu0 %643
        %647 = vset.pattern.permute.xlu0 0
        %648 = vperm.xlu0 %647, %v268
        %v649 = vpop.permute.xlu0 %648
        %652 = vset.pattern.permute.xlu0 0
        %653 = vperm.xlu0 %652, %v269
        %v654 = vpop.permute.xlu0 %653
        %v656 = vadd.f32 %v552, %v619
        %v657 = vadd.f32 %v553, %v619
        %v658 = vadd.f32 %v554, %v619
        %v659 = vadd.f32 %v555, %v619
        %v660 = vadd.f32 %v556, %v619
        %v661 = vadd.f32 %v557, %v619
        %v662 = vadd.f32 %v558, %v619
        %v663 = vadd.f32 %v559, %v619
        %v664 = vadd.f32 %v560, %v624
        %v665 = vadd.f32 %v561, %v624
        %v666 = vadd.f32 %v562, %v624
        %v667 = vadd.f32 %v563, %v624
        %v668 = vadd.f32 %v564, %v624
        %v669 = vadd.f32 %v565, %v624
        %v670 = vadd.f32 %v566, %v624
        %v671 = vadd.f32 %v567, %v624
        %v672 = vadd.f32 %v568, %v629
        %v673 = vadd.f32 %v569, %v629
        %v674 = vadd.f32 %v570, %v629
        %v675 = vadd.f32 %v571, %v629
        %v676 = vadd.f32 %v572, %v629
        %v677 = vadd.f32 %v573, %v629
        %v678 = vadd.f32 %v574, %v629
        %v679 = vadd.f32 %v575, %v629
        %v680 = vadd.f32 %v576, %v634
        %v681 = vadd.f32 %v577, %v634
        %v682 = vadd.f32 %v578, %v634
        %v683 = vadd.f32 %v579, %v634
        %v684 = vadd.f32 %v580, %v634
        %v685 = vadd.f32 %v581, %v634
        %v686 = vadd.f32 %v582, %v634
        %v687 = vadd.f32 %v583, %v634
        %v688 = vadd.f32 %v584, %v639
        %v689 = vadd.f32 %v585, %v639
        %v690 = vadd.f32 %v586, %v639
        %v691 = vadd.f32 %v587, %v639
        %v692 = vadd.f32 %v588, %v639
        %v693 = vadd.f32 %v589, %v639
        %v694 = vadd.f32 %v590, %v639
        %v695 = vadd.f32 %v591, %v639
        %v696 = vadd.f32 %v592, %v644
        %v697 = vadd.f32 %v593, %v644
        %v698 = vadd.f32 %v594, %v644
        %v699 = vadd.f32 %v595, %v644
        %v700 = vadd.f32 %v596, %v644
        %v701 = vadd.f32 %v597, %v644
        %v702 = vadd.f32 %v598, %v644
        %v703 = vadd.f32 %v599, %v644
        %v704 = vadd.f32 %v600, %v649
        %v705 = vadd.f32 %v601, %v649
        %v706 = vadd.f32 %v602, %v649
        %v707 = vadd.f32 %v603, %v649
        %v708 = vadd.f32 %v604, %v649
        %v709 = vadd.f32 %v605, %v649
        %v710 = vadd.f32 %v606, %v649
        %v711 = vadd.f32 %v607, %v649
        %v712 = vadd.f32 %v608, %v654
        %v713 = vadd.f32 %v609, %v654
        %v714 = vadd.f32 %v610, %v654
        %v715 = vadd.f32 %v611, %v654
        %v716 = vadd.f32 %v612, %v654
        %v717 = vadd.f32 %v613, %v654
        %v718 = vadd.f32 %v614, %v654
        %v719 = vadd.f32 %v615, %v654
        %v720 = vmax.f32 %v656, 0.0
        %v721 = vmax.f32 %v657, 0.0
        %v722 = vmax.f32 %v658, 0.0
        %v723 = vmax.f32 %v659, 0.0
        %v724 = vmax.f32 %v660, 0.0
        %v725 = vmax.f32 %v661, 0.0
        %v726 = vmax.f32 %v662, 0.0
        %v727 = vmax.f32 %v663, 0.0
        %v728 = vmax.f32 %v664, 0.0
        %v729 = vmax.f32 %v665, 0.0
        %v730 = vmax.f32 %v666, 0.0
        %v731 = vmax.f32 %v667, 0.0
        %v732 = vmax.f32 %v668, 0.0
        %v733 = vmax.f32 %v669, 0.0
        %v734 = vmax.f32 %v670, 0.0
        %v735 = vmax.f32 %v671, 0.0
        %v736 = vmax.f32 %v672, 0.0
        %v737 = vmax.f32 %v673, 0.0
        %v738 = vmax.f32 %v674, 0.0
        %v739 = vmax.f32 %v675, 0.0
        %v740 = vmax.f32 %v676, 0.0
        %v741 = vmax.f32 %v677, 0.0
        %v742 = vmax.f32 %v678, 0.0
        %v743 = vmax.f32 %v679, 0.0
        %v744 = vmax.f32 %v680, 0.0
        %v745 = vmax.f32 %v681, 0.0
        %v746 = vmax.f32 %v682, 0.0
        %v747 = vmax.f32 %v683, 0.0
        %v748 = vmax.f32 %v684, 0.0
        %v749 = vmax.f32 %v685, 0.0
        %v750 = vmax.f32 %v686, 0.0
        %v751 = vmax.f32 %v687, 0.0
        %v752 = vmax.f32 %v688, 0.0
        %v753 = vmax.f32 %v689, 0.0
        %v754 = vmax.f32 %v690, 0.0
        %v755 = vmax.f32 %v691, 0.0
        %v756 = vmax.f32 %v692, 0.0
        %v757 = vmax.f32 %v693, 0.0
        %v758 = vmax.f32 %v694, 0.0
        %v759 = vmax.f32 %v695, 0.0
        %v760 = vmax.f32 %v696, 0.0
        %v761 = vmax.f32 %v697, 0.0
        %v762 = vmax.f32 %v698, 0.0
        %v763 = vmax.f32 %v699, 0.0
        %v764 = vmax.f32 %v700, 0.0
        %v765 = vmax.f32 %v701, 0.0
        %v766 = vmax.f32 %v702, 0.0
        %v767 = vmax.f32 %v703, 0.0
        %v768 = vmax.f32 %v704, 0.0
        %v769 = vmax.f32 %v705, 0.0
        %v770 = vmax.f32 %v706, 0.0
        %v771 = vmax.f32 %v707, 0.0
        %v772 = vmax.f32 %v708, 0.0
        %v773 = vmax.f32 %v709, 0.0
        %v774 = vmax.f32 %v710, 0.0
        %v775 = vmax.f32 %v711, 0.0
        %v776 = vmax.f32 %v712, 0.0
        %v777 = vmax.f32 %v713, 0.0
        %v778 = vmax.f32 %v714, 0.0
        %v779 = vmax.f32 %v715, 0.0
        %v780 = vmax.f32 %v716, 0.0
        %v781 = vmax.f32 %v717, 0.0
        %v782 = vmax.f32 %v718, 0.0
        %v783 = vmax.f32 %v719, 0.0
        %s784 = scalar_lea.vmem %s2, 64
        %v785 = vld [vmem:[%s784] sm:$0xff]
        %v786 = vld [vmem:[%s784 + $0x8] sm:$0xff]
        %s787 = scalar_lea.vmem %s3, 64
        %v788 = vld [vmem:[%s787] sm:$0xff]
        %v789 = vld [vmem:[%s787 + $0x8] sm:$0xff]
        %791 = vset.pattern.permute.xlu0 0
        %792 = vperm.xlu0 %791, %v788
        %v793 = vpop.permute.xlu0 %792
        %796 = vset.pattern.permute.xlu0 0
        %797 = vperm.xlu0 %796, %v789
        %v798 = vpop.permute.xlu0 %797
        %vm800 = vcmask 523264
        %v802 = vsel %vm800, %v785, 0
        %v805 = vsel %vm800, %v786, 0
        %807 = vmatprep.subr.mxu0 %v721
        %808 = vmatpush1.msra.mxu0 %v720
        %809 = vmatprep.subr.mxu0 %v729
        %810 = vmatpush1.msra.mxu0 %v728
        %811 = vmatprep.subr.mxu0 %v737
        %812 = vmatpush1.msra.mxu0 %v736
        %813 = vmatprep.subr.mxu0 %v745
        %814 = vmatpush1.msra.mxu0 %v744
        %815 = vmatprep.subr.mxu0 %v753
        %816 = vmatpush1.msra.mxu0 %v752
        %817 = vmatprep.subr.mxu0 %v761
        %818 = vmatpush1.msra.mxu0 %v760
        %819 = vmatprep.subr.mxu0 %v769
        %820 = vmatpush1.msra.mxu0 %v768
        %821 = vmatprep.subr.mxu0 %v777
        %822 = vmatpush1.msra.mxu0 %v776
        %823 = vmatprep.subr.mxu0 0.0
        %824 = vmatpush1.msra.mxu0 0.0
        %825 = vmatprep.subr.mxu0 0.0
        %826 = vmatpush1.msra.mxu0 0.0
        %827 = vmatprep.subr.mxu0 0.0
        %828 = vmatpush1.msra.mxu0 0.0
        %829 = vmatprep.subr.mxu0 0.0
        %830 = vmatpush1.msra.mxu0 0.0
        %831 = vmatprep.subr.mxu0 0.0
        %832 = vmatpush1.msra.mxu0 0.0
        %833 = vmatprep.subr.mxu0 0.0
        %834 = vmatpush1.msra.mxu0 0.0
        %835 = vmatprep.subr.mxu0 0.0
        %836 = vmatpush1.msra.mxu0 0.0
        %837 = vmatprep.subr.mxu0 0.0
        %838 = vmatpush1.msra.mxu0 0.0
        %839 = vmatprep.subr.mxu0 0.0
        %840 = vmatpush1.msra.mxu0 0.0
        %841 = vmatprep.subr.mxu0 0.0
        %842 = vmatpush1.msra.mxu0 0.0
        %843 = vmatprep.subr.mxu0 0.0
        %844 = vmatpush1.msra.mxu0 0.0
        %845 = vmatprep.subr.mxu0 0.0
        %846 = vmatpush1.msra.mxu0 0.0
        %847 = vmatprep.subr.mxu0 0.0
        %848 = vmatpush1.msra.mxu0 0.0
        %849 = vmatprep.subr.mxu0 0.0
        %850 = vmatpush1.msra.mxu0 0.0
        %851 = vmatprep.subr.mxu0 0.0
        %852 = vmatpush1.msra.mxu0 0.0
        %853 = vmatprep.subr.mxu0 0.0
        %854 = vmatpush1.msra.mxu0 0.0
        %855 = vmatprep.subr.mxu0 0.0
        %856 = vmatpush1.msra.mxu0 0.0
        %857 = vmatprep.subr.mxu0 0.0
        %858 = vmatpush1.msra.mxu0 0.0
        %859 = vmatprep.subr.mxu0 0.0
        %860 = vmatpush1.msra.mxu0 0.0
        %861 = vmatprep.subr.mxu0 0.0
        %862 = vmatpush1.msra.mxu0 0.0
        %863 = vmatprep.subr.mxu0 0.0
        %864 = vmatpush1.msra.mxu0 0.0
        %865 = vmatprep.subr.mxu0 0.0
        %866 = vmatpush1.msra.mxu0 0.0
        %867 = vmatprep.subr.mxu0 0.0
        %868 = vmatpush1.msra.mxu0 0.0
        %869 = vmatprep.subr.mxu0 0.0
        %870 = vmatpush1.msra.mxu0 0.0
        %871 = vmatprep.mubr.f32.mxu0 0.0
        %872 = vmatmul.mubr.f32.gmra.mrb[0].mxu0 %v802
        %v873 = vpop.f32.mrb[0].mxu0
        %v874 = vadd.f32 %v793, %v873
        %v875 = vpop.f32.mrb[0].mxu0
        %v876 = vadd.f32 %v793, %v875
        %877 = vmatprep.mubr.f32.mxu0 0.0
        %878 = vmatmul.mubr.f32.gmra.mrb[0].mxu0 %v805
        %v879 = vpop.f32.mrb[0].mxu0
        %v880 = vadd.f32 %v798, %v879
        %v881 = vpop.f32.mrb[0].mxu0
        %v882 = vadd.f32 %v798, %v881
        %883 = vdwg.mxu0
        %884 = vmatprep.subr.mxu0 %v723
        %885 = vmatpush1.msra.mxu0 %v722
        %886 = vmatprep.subr.mxu0 %v731
        %887 = vmatpush1.msra.mxu0 %v730
        %888 = vmatprep.subr.mxu0 %v739
        %889 = vmatpush1.msra.mxu0 %v738
        %890 = vmatprep.subr.mxu0 %v747
        %891 = vmatpush1.msra.mxu0 %v746
        %892 = vmatprep.subr.mxu0 %v755
        %893 = vmatpush1.msra.mxu0 %v754
        %894 = vmatprep.subr.mxu0 %v763
        %895 = vmatpush1.msra.mxu0 %v762
        %896 = vmatprep.subr.mxu0 %v771
        %897 = vmatpush1.msra.mxu0 %v770
        %898 = vmatprep.subr.mxu0 %v779
        %899 = vmatpush1.msra.mxu0 %v778
        %900 = vmatprep.subr.mxu0 0.0
        %901 = vmatpush1.msra.mxu0 0.0
        %902 = vmatprep.subr.mxu0 0.0
        %903 = vmatpush1.msra.mxu0 0.0
        %904 = vmatprep.subr.mxu0 0.0
        %905 = vmatpush1.msra.mxu0 0.0
        %906 = vmatprep.subr.mxu0 0.0
        %907 = vmatpush1.msra.mxu0 0.0
        %908 = vmatprep.subr.mxu0 0.0
        %909 = vmatpush1.msra.mxu0 0.0
        %910 = vmatprep.subr.mxu0 0.0
        %911 = vmatpush1.msra.mxu0 0.0
        %912 = vmatprep.subr.mxu0 0.0
        %913 = vmatpush1.msra.mxu0 0.0
        %914 = vmatprep.subr.mxu0 0.0
        %915 = vmatpush1.msra.mxu0 0.0
        %916 = vmatprep.subr.mxu0 0.0
        %917 = vmatpush1.msra.mxu0 0.0
        %918 = vmatprep.subr.mxu0 0.0
        %919 = vmatpush1.msra.mxu0 0.0
        %920 = vmatprep.subr.mxu0 0.0
        %921 = vmatpush1.msra.mxu0 0.0
        %922 = vmatprep.subr.mxu0 0.0
        %923 = vmatpush1.msra.mxu0 0.0
        %924 = vmatprep.subr.mxu0 0.0
        %925 = vmatpush1.msra.mxu0 0.0
        %926 = vmatprep.subr.mxu0 0.0
        %927 = vmatpush1.msra.mxu0 0.0
        %928 = vmatprep.subr.mxu0 0.0
        %929 = vmatpush1.msra.mxu0 0.0
        %930 = vmatprep.subr.mxu0 0.0
        %931 = vmatpush1.msra.mxu0 0.0
        %932 = vmatprep.subr.mxu0 0.0
        %933 = vmatpush1.msra.mxu0 0.0
        %934 = vmatprep.subr.mxu0 0.0
        %935 = vmatpush1.msra.mxu0 0.0
        %936 = vmatprep.subr.mxu0 0.0
        %937 = vmatpush1.msra.mxu0 0.0
        %938 = vmatprep.subr.mxu0 0.0
        %939 = vmatpush1.msra.mxu0 0.0
        %940 = vmatprep.subr.mxu0 0.0
        %941 = vmatpush1.msra.mxu0 0.0
        %942 = vmatprep.subr.mxu0 0.0
        %943 = vmatpush1.msra.mxu0 0.0
        %944 = vmatprep.subr.mxu0 0.0
        %945 = vmatpush1.msra.mxu0 0.0
        %946 = vmatprep.subr.mxu0 0.0
        %947 = vmatpush1.msra.mxu0 0.0
        %948 = vmatprep.mubr.f32.mxu0 0.0
        %949 = vmatmul.mubr.f32.gmra.mrb[0].mxu0 %v802
        %v950 = vpop.f32.mrb[0].mxu0
        %v951 = vadd.f32 %v793, %v950
        %v952 = vpop.f32.mrb[0].mxu0
        %v953 = vadd.f32 %v793, %v952
        %954 = vmatprep.mubr.f32.mxu0 0.0
        %955 = vmatmul.mubr.f32.gmra.mrb[0].mxu0 %v805
        %v956 = vpop.f32.mrb[0].mxu0
        %v957 = vadd.f32 %v798, %v956
        %v958 = vpop.f32.mrb[0].mxu0
        %v959 = vadd.f32 %v798, %v958
        %960 = vdwg.mxu0
        %961 = vmatprep.subr.mxu0 %v725
        %962 = vmatpush1.msra.mxu0 %v724
        %963 = vmatprep.subr.mxu0 %v733
        %964 = vmatpush1.msra.mxu0 %v732
        %965 = vmatprep.subr.mxu0 %v741
        %966 = vmatpush1.msra.mxu0 %v740
        %967 = vmatprep.subr.mxu0 %v749
        %968 = vmatpush1.msra.mxu0 %v748
        %969 = vmatprep.subr.mxu0 %v757
        %970 = vmatpush1.msra.mxu0 %v756
        %971 = vmatprep.subr.mxu0 %v765
        %972 = vmatpush1.msra.mxu0 %v764
        %973 = vmatprep.subr.mxu0 %v773
        %974 = vmatpush1.msra.mxu0 %v772
        %975 = vmatprep.subr.mxu0 %v781
        %976 = vmatpush1.msra.mxu0 %v780
        %977 = vmatprep.subr.mxu0 0.0
        %978 = vmatpush1.msra.mxu0 0.0
        %979 = vmatprep.subr.mxu0 0.0
        %980 = vmatpush1.msra.mxu0 0.0
        %981 = vmatprep.subr.mxu0 0.0
        %982 = vmatpush1.msra.mxu0 0.0
        %983 = vmatprep.subr.mxu0 0.0
        %984 = vmatpush1.msra.mxu0 0.0
        %985 = vmatprep.subr.mxu0 0.0
        %986 = vmatpush1.msra.mxu0 0.0
        %987 = vmatprep.subr.mxu0 0.0
        %988 = vmatpush1.msra.mxu0 0.0
        %989 = vmatprep.subr.mxu0 0.0
        %990 = vmatpush1.msra.mxu0 0.0
        %991 = vmatprep.subr.mxu0 0.0
        %992 = vmatpush1.msra.mxu0 0.0
        %993 = vmatprep.subr.mxu0 0.0
        %994 = vmatpush1.msra.mxu0 0.0
        %995 = vmatprep.subr.mxu0 0.0
        %996 = vmatpush1.msra.mxu0 0.0
        %997 = vmatprep.subr.mxu0 0.0
        %998 = vmatpush1.msra.mxu0 0.0
        %999 = vmatprep.subr.mxu0 0.0
        %1000 = vmatpush1.msra.mxu0 0.0
        %1001 = vmatprep.subr.mxu0 0.0
        %1002 = vmatpush1.msra.mxu0 0.0
        %1003 = vmatprep.subr.mxu0 0.0
        %1004 = vmatpush1.msra.mxu0 0.0
        %1005 = vmatprep.subr.mxu0 0.0
        %1006 = vmatpush1.msra.mxu0 0.0
        %1007 = vmatprep.subr.mxu0 0.0
        %1008 = vmatpush1.msra.mxu0 0.0
        %1009 = vmatprep.subr.mxu0 0.0
        %1010 = vmatpush1.msra.mxu0 0.0
        %1011 = vmatprep.subr.mxu0 0.0
        %1012 = vmatpush1.msra.mxu0 0.0
        %1013 = vmatprep.subr.mxu0 0.0
        %1014 = vmatpush1.msra.mxu0 0.0
        %1015 = vmatprep.subr.mxu0 0.0
        %1016 = vmatpush1.msra.mxu0 0.0
        %1017 = vmatprep.subr.mxu0 0.0
        %1018 = vmatpush1.msra.mxu0 0.0
        %1019 = vmatprep.subr.mxu0 0.0
        %1020 = vmatpush1.msra.mxu0 0.0
        %1021 = vmatprep.subr.mxu0 0.0
        %1022 = vmatpush1.msra.mxu0 0.0
        %1023 = vmatprep.subr.mxu0 0.0
        %1024 = vmatpush1.msra.mxu0 0.0
        %1025 = vmatprep.mubr.f32.mxu0 0.0
        %1026 = vmatmul.mubr.f32.gmra.mrb[0].mxu0 %v802
        %v1027 = vpop.f32.mrb[0].mxu0
        %v1028 = vadd.f32 %v793, %v1027
        %v1029 = vpop.f32.mrb[0].mxu0
        %v1030 = vadd.f32 %v793, %v1029
        %1031 = vmatprep.mubr.f32.mxu0 0.0
        %1032 = vmatmul.mubr.f32.gmra.mrb[0].mxu0 %v805
        %v1033 = vpop.f32.mrb[0].mxu0
        %v1034 = vadd.f32 %v798, %v1033
        %v1035 = vpop.f32.mrb[0].mxu0
        %v1036 = vadd.f32 %v798, %v1035
        %1037 = vdwg.mxu0
        %1038 = vmatprep.subr.mxu0 %v727
        %1039 = vmatpush1.msra.mxu0 %v726
        %1040 = vmatprep.subr.mxu0 %v735
        %1041 = vmatpush1.msra.mxu0 %v734
        %1042 = vmatprep.subr.mxu0 %v743
        %1043 = vmatpush1.msra.mxu0 %v742
        %1044 = vmatprep.subr.mxu0 %v751
        %1045 = vmatpush1.msra.mxu0 %v750
        %1046 = vmatprep.subr.mxu0 %v759
        %1047 = vmatpush1.msra.mxu0 %v758
        %1048 = vmatprep.subr.mxu0 %v767
        %1049 = vmatpush1.msra.mxu0 %v766
        %1050 = vmatprep.subr.mxu0 %v775
        %1051 = vmatpush1.msra.mxu0 %v774
        %1052 = vmatprep.subr.mxu0 %v783
        %1053 = vmatpush1.msra.mxu0 %v782
        %1054 = vmatprep.subr.mxu0 0.0
        %1055 = vmatpush1.msra.mxu0 0.0
        %1056 = vmatprep.subr.mxu0 0.0
        %1057 = vmatpush1.msra.mxu0 0.0
        %1058 = vmatprep.subr.mxu0 0.0
        %1059 = vmatpush1.msra.mxu0 0.0
        %1060 = vmatprep.subr.mxu0 0.0
        %1061 = vmatpush1.msra.mxu0 0.0
        %1062 = vmatprep.subr.mxu0 0.0
        %1063 = vmatpush1.msra.mxu0 0.0
        %1064 = vmatprep.subr.mxu0 0.0
        %1065 = vmatpush1.msra.mxu0 0.0
        %1066 = vmatprep.subr.mxu0 0.0
        %1067 = vmatpush1.msra.mxu0 0.0
        %1068 = vmatprep.subr.mxu0 0.0
        %1069 = vmatpush1.msra.mxu0 0.0
        %1070 = vmatprep.subr.mxu0 0.0
        %1071 = vmatpush1.msra.mxu0 0.0
        %1072 = vmatprep.subr.mxu0 0.0
        %1073 = vmatpush1.msra.mxu0 0.0
        %1074 = vmatprep.subr.mxu0 0.0
        %1075 = vmatpush1.msra.mxu0 0.0
        %1076 = vmatprep.subr.mxu0 0.0
        %1077 = vmatpush1.msra.mxu0 0.0
        %1078 = vmatprep.subr.mxu0 0.0
        %1079 = vmatpush1.msra.mxu0 0.0
        %1080 = vmatprep.subr.mxu0 0.0
        %1081 = vmatpush1.msra.mxu0 0.0
        %1082 = vmatprep.subr.mxu0 0.0
        %1083 = vmatpush1.msra.mxu0 0.0
        %1084 = vmatprep.subr.mxu0 0.0
        %1085 = vmatpush1.msra.mxu0 0.0
        %1086 = vmatprep.subr.mxu0 0.0
        %1087 = vmatpush1.msra.mxu0 0.0
        %1088 = vmatprep.subr.mxu0 0.0
        %1089 = vmatpush1.msra.mxu0 0.0
        %1090 = vmatprep.subr.mxu0 0.0
        %1091 = vmatpush1.msra.mxu0 0.0
        %1092 = vmatprep.subr.mxu0 0.0
        %1093 = vmatpush1.msra.mxu0 0.0
        %1094 = vmatprep.subr.mxu0 0.0
        %1095 = vmatpush1.msra.mxu0 0.0
        %1096 = vmatprep.subr.mxu0 0.0
        %1097 = vmatpush1.msra.mxu0 0.0
        %1098 = vmatprep.subr.mxu0 0.0
        %1099 = vmatpush1.msra.mxu0 0.0
        %1100 = vmatprep.subr.mxu0 0.0
        %1101 = vmatpush1.msra.mxu0 0.0
        %1102 = vmatprep.mubr.f32.mxu0 0.0
        %1103 = vmatmul.mubr.f32.gmra.mrb[0].mxu0 %v802
        %v1104 = vpop.f32.mrb[0].mxu0
        %v1105 = vadd.f32 %v793, %v1104
        %v1106 = vpop.f32.mrb[0].mxu0
        %v1107 = vadd.f32 %v793, %v1106
        %1108 = vmatprep.mubr.f32.mxu0 0.0
        %1109 = vmatmul.mubr.f32.gmra.mrb[0].mxu0 %v805
        %v1110 = vpop.f32.mrb[0].mxu0
        %v1111 = vadd.f32 %v798, %v1110
        %v1112 = vpop.f32.mrb[0].mxu0
        %v1113 = vadd.f32 %v798, %v1112
        %1114 = vdwg.mxu0
        %v1115 = vmax.f32 %v874, 0.0
        %v1116 = vmax.f32 %v876, 0.0
        %v1117 = vmax.f32 %v951, 0.0
        %v1118 = vmax.f32 %v953, 0.0
        %v1119 = vmax.f32 %v1028, 0.0
        %v1120 = vmax.f32 %v1030, 0.0
        %v1121 = vmax.f32 %v1105, 0.0
        %v1122 = vmax.f32 %v1107, 0.0
        %v1123 = vmax.f32 %v880, 0.0
        %v1124 = vmax.f32 %v882, 0.0
        %v1125 = vmax.f32 %v957, 0.0
        %v1126 = vmax.f32 %v959, 0.0
        %v1127 = vmax.f32 %v1034, 0.0
        %v1128 = vmax.f32 %v1036, 0.0
        %v1129 = vmax.f32 %v1111, 0.0
        %v1130 = vmax.f32 %v1113, 0.0
        %s1131 = scalar_lea.vmem %s2, 128
        %v1132 = vld [vmem:[%s1131] sm:$0xff]
        %s1133 = scalar_lea.vmem %s3, 128
        %v1134 = vld [vmem:[%s1133] sm:$0xff]
        %1136 = vset.pattern.permute.xlu0 0
        %1137 = vperm.xlu0 %1136, %v1134
        %v1138 = vpop.permute.xlu0 %1137
        %vm1140 = vcmask 130048
        %v1142 = vsel %vm1140, %v1132, 0
        %1144 = vmatprep.subr.mxu0 %v1116
        %1145 = vmatpush1.msra.mxu0 %v1115
        %1146 = vmatprep.subr.mxu0 %v1124
        %1147 = vmatpush1.msra.mxu0 %v1123
        %1148 = vmatprep.subr.mxu0 0.0
        %1149 = vmatpush1.msra.mxu0 0.0
        %1150 = vmatprep.subr.mxu0 0.0
        %1151 = vmatpush1.msra.mxu0 0.0
        %1152 = vmatprep.subr.mxu0 0.0
        %1153 = vmatpush1.msra.mxu0 0.0
        %1154 = vmatprep.subr.mxu0 0.0
        %1155 = vmatpush1.msra.mxu0 0.0
        %1156 = vmatprep.subr.mxu0 0.0
        %1157 = vmatpush1.msra.mxu0 0.0
        %1158 = vmatprep.subr.mxu0 0.0
        %1159 = vmatpush1.msra.mxu0 0.0
        %1160 = vmatprep.subr.mxu0 0.0
        %1161 = vmatpush1.msra.mxu0 0.0
        %1162 = vmatprep.subr.mxu0 0.0
        %1163 = vmatpush1.msra.mxu0 0.0
        %1164 = vmatprep.subr.mxu0 0.0
        %1165 = vmatpush1.msra.mxu0 0.0
        %1166 = vmatprep.subr.mxu0 0.0
        %1167 = vmatpush1.msra.mxu0 0.0
        %1168 = vmatprep.subr.mxu0 0.0
        %1169 = vmatpush1.msra.mxu0 0.0
        %1170 = vmatprep.subr.mxu0 0.0
        %1171 = vmatpush1.msra.mxu0 0.0
        %1172 = vmatprep.subr.mxu0 0.0
        %1173 = vmatpush1.msra.mxu0 0.0
        %1174 = vmatprep.subr.mxu0 0.0
        %1175 = vmatpush1.msra.mxu0 0.0
        %1176 = vmatprep.subr.mxu0 0.0
        %1177 = vmatpush1.msra.mxu0 0.0
        %1178 = vmatprep.subr.mxu0 0.0
        %1179 = vmatpush1.msra.mxu0 0.0
        %1180 = vmatprep.subr.mxu0 0.0
        %1181 = vmatpush1.msra.mxu0 0.0
        %1182 = vmatprep.subr.mxu0 0.0
        %1183 = vmatpush1.msra.mxu0 0.0
        %1184 = vmatprep.subr.mxu0 0.0
        %1185 = vmatpush1.msra.mxu0 0.0
        %1186 = vmatprep.subr.mxu0 0.0
        %1187 = vmatpush1.msra.mxu0 0.0
        %1188 = vmatprep.subr.mxu0 0.0
        %1189 = vmatpush1.msra.mxu0 0.0
        %1190 = vmatprep.subr.mxu0 0.0
        %1191 = vmatpush1.msra.mxu0 0.0
        %1192 = vmatprep.subr.mxu0 0.0
        %1193 = vmatpush1.msra.mxu0 0.0
        %1194 = vmatprep.subr.mxu0 0.0
        %1195 = vmatpush1.msra.mxu0 0.0
        %1196 = vmatprep.subr.mxu0 0.0
        %1197 = vmatpush1.msra.mxu0 0.0
        %1198 = vmatprep.subr.mxu0 0.0
        %1199 = vmatpush1.msra.mxu0 0.0
        %1200 = vmatprep.subr.mxu0 0.0
        %1201 = vmatpush1.msra.mxu0 0.0
        %1202 = vmatprep.subr.mxu0 0.0
        %1203 = vmatpush1.msra.mxu0 0.0
        %1204 = vmatprep.subr.mxu0 0.0
        %1205 = vmatpush1.msra.mxu0 0.0
        %1206 = vmatprep.subr.mxu0 0.0
        %1207 = vmatpush1.msra.mxu0 0.0
        %1208 = vmatprep.mubr.f32.mxu0 0.0
        %1209 = vmatmul.mubr.f32.gmra.mrb[0].mxu0 %v1142
        %v1210 = vpop.f32.mrb[0].mxu0
        %v1211 = vadd.f32 %v1138, %v1210
        %v1212 = vpop.f32.mrb[0].mxu0
        %v1213 = vadd.f32 %v1138, %v1212
        %1214 = vdwg.mxu0
        %1215 = vmatprep.subr.mxu0 %v1118
        %1216 = vmatpush1.msra.mxu0 %v1117
        %1217 = vmatprep.subr.mxu0 %v1126
        %1218 = vmatpush1.msra.mxu0 %v1125
        %1219 = vmatprep.subr.mxu0 0.0
        %1220 = vmatpush1.msra.mxu0 0.0
        %1221 = vmatprep.subr.mxu0 0.0
        %1222 = vmatpush1.msra.mxu0 0.0
        %1223 = vmatprep.subr.mxu0 0.0
        %1224 = vmatpush1.msra.mxu0 0.0
        %1225 = vmatprep.subr.mxu0 0.0
        %1226 = vmatpush1.msra.mxu0 0.0
        %1227 = vmatprep.subr.mxu0 0.0
        %1228 = vmatpush1.msra.mxu0 0.0
        %1229 = vmatprep.subr.mxu0 0.0
        %1230 = vmatpush1.msra.mxu0 0.0
        %1231 = vmatprep.subr.mxu0 0.0
        %1232 = vmatpush1.msra.mxu0 0.0
        %1233 = vmatprep.subr.mxu0 0.0
        %1234 = vmatpush1.msra.mxu0 0.0
        %1235 = vmatprep.subr.mxu0 0.0
        %1236 = vmatpush1.msra.mxu0 0.0
        %1237 = vmatprep.subr.mxu0 0.0
        %1238 = vmatpush1.msra.mxu0 0.0
        %1239 = vmatprep.subr.mxu0 0.0
        %1240 = vmatpush1.msra.mxu0 0.0
        %1241 = vmatprep.subr.mxu0 0.0
        %1242 = vmatpush1.msra.mxu0 0.0
        %1243 = vmatprep.subr.mxu0 0.0
        %1244 = vmatpush1.msra.mxu0 0.0
        %1245 = vmatprep.subr.mxu0 0.0
        %1246 = vmatpush1.msra.mxu0 0.0
        %1247 = vmatprep.subr.mxu0 0.0
        %1248 = vmatpush1.msra.mxu0 0.0
        %1249 = vmatprep.subr.mxu0 0.0
        %1250 = vmatpush1.msra.mxu0 0.0
        %1251 = vmatprep.subr.mxu0 0.0
        %1252 = vmatpush1.msra.mxu0 0.0
        %1253 = vmatprep.subr.mxu0 0.0
        %1254 = vmatpush1.msra.mxu0 0.0
        %1255 = vmatprep.subr.mxu0 0.0
        %1256 = vmatpush1.msra.mxu0 0.0
        %1257 = vmatprep.subr.mxu0 0.0
        %1258 = vmatpush1.msra.mxu0 0.0
        %1259 = vmatprep.subr.mxu0 0.0
        %1260 = vmatpush1.msra.mxu0 0.0
        %1261 = vmatprep.subr.mxu0 0.0
        %1262 = vmatpush1.msra.mxu0 0.0
        %1263 = vmatprep.subr.mxu0 0.0
        %1264 = vmatpush1.msra.mxu0 0.0
        %1265 = vmatprep.subr.mxu0 0.0
        %1266 = vmatpush1.msra.mxu0 0.0
        %1267 = vmatprep.subr.mxu0 0.0
        %1268 = vmatpush1.msra.mxu0 0.0
        %1269 = vmatprep.subr.mxu0 0.0
        %1270 = vmatpush1.msra.mxu0 0.0
        %1271 = vmatprep.subr.mxu0 0.0
        %1272 = vmatpush1.msra.mxu0 0.0
        %1273 = vmatprep.subr.mxu0 0.0
        %1274 = vmatpush1.msra.mxu0 0.0
        %1275 = vmatprep.subr.mxu0 0.0
        %1276 = vmatpush1.msra.mxu0 0.0
        %1277 = vmatprep.subr.mxu0 0.0
        %1278 = vmatpush1.msra.mxu0 0.0
        %1279 = vmatprep.mubr.f32.mxu0 0.0
        %1280 = vmatmul.mubr.f32.gmra.mrb[0].mxu0 %v1142
        %v1281 = vpop.f32.mrb[0].mxu0
        %v1282 = vadd.f32 %v1138, %v1281
        %v1283 = vpop.f32.mrb[0].mxu0
        %v1284 = vadd.f32 %v1138, %v1283
        %1285 = vdwg.mxu0
        %1286 = vmatprep.subr.mxu0 %v1120
        %1287 = vmatpush1.msra.mxu0 %v1119
        %1288 = vmatprep.subr.mxu0 %v1128
        %1289 = vmatpush1.msra.mxu0 %v1127
        %1290 = vmatprep.subr.mxu0 0.0
        %1291 = vmatpush1.msra.mxu0 0.0
        %1292 = vmatprep.subr.mxu0 0.0
        %1293 = vmatpush1.msra.mxu0 0.0
        %1294 = vmatprep.subr.mxu0 0.0
        %1295 = vmatpush1.msra.mxu0 0.0
        %1296 = vmatprep.subr.mxu0 0.0
        %1297 = vmatpush1.msra.mxu0 0.0
        %1298 = vmatprep.subr.mxu0 0.0
        %1299 = vmatpush1.msra.mxu0 0.0
        %1300 = vmatprep.subr.mxu0 0.0
        %1301 = vmatpush1.msra.mxu0 0.0
        %1302 = vmatprep.subr.mxu0 0.0
        %1303 = vmatpush1.msra.mxu0 0.0
        %1304 = vmatprep.subr.mxu0 0.0
        %1305 = vmatpush1.msra.mxu0 0.0
        %1306 = vmatprep.subr.mxu0 0.0
        %1307 = vmatpush1.msra.mxu0 0.0
        %1308 = vmatprep.subr.mxu0 0.0
        %1309 = vmatpush1.msra.mxu0 0.0
        %1310 = vmatprep.subr.mxu0 0.0
        %1311 = vmatpush1.msra.mxu0 0.0
        %1312 = vmatprep.subr.mxu0 0.0
        %1313 = vmatpush1.msra.mxu0 0.0
        %1314 = vmatprep.subr.mxu0 0.0
        %1315 = vmatpush1.msra.mxu0 0.0
        %1316 = vmatprep.subr.mxu0 0.0
        %1317 = vmatpush1.msra.mxu0 0.0
        %1318 = vmatprep.subr.mxu0 0.0
        %1319 = vmatpush1.msra.mxu0 0.0
        %1320 = vmatprep.subr.mxu0 0.0
        %1321 = vmatpush1.msra.mxu0 0.0
        %1322 = vmatprep.subr.mxu0 0.0
        %1323 = vmatpush1.msra.mxu0 0.0
        %1324 = vmatprep.subr.mxu0 0.0
        %1325 = vmatpush1.msra.mxu0 0.0
        %1326 = vmatprep.subr.mxu0 0.0
        %1327 = vmatpush1.msra.mxu0 0.0
        %1328 = vmatprep.subr.mxu0 0.0
        %1329 = vmatpush1.msra.mxu0 0.0
        %1330 = vmatprep.subr.mxu0 0.0
        %1331 = vmatpush1.msra.mxu0 0.0
        %1332 = vmatprep.subr.mxu0 0.0
        %1333 = vmatpush1.msra.mxu0 0.0
        %1334 = vmatprep.subr.mxu0 0.0
        %1335 = vmatpush1.msra.mxu0 0.0
        %1336 = vmatprep.subr.mxu0 0.0
        %1337 = vmatpush1.msra.mxu0 0.0
        %1338 = vmatprep.subr.mxu0 0.0
        %1339 = vmatpush1.msra.mxu0 0.0
        %1340 = vmatprep.subr.mxu0 0.0
        %1341 = vmatpush1.msra.mxu0 0.0
        %1342 = vmatprep.subr.mxu0 0.0
        %1343 = vmatpush1.msra.mxu0 0.0
        %1344 = vmatprep.subr.mxu0 0.0
        %1345 = vmatpush1.msra.mxu0 0.0
        %1346 = vmatprep.subr.mxu0 0.0
        %1347 = vmatpush1.msra.mxu0 0.0
        %1348 = vmatprep.subr.mxu0 0.0
        %1349 = vmatpush1.msra.mxu0 0.0
        %1350 = vmatprep.mubr.f32.mxu0 0.0
        %1351 = vmatmul.mubr.f32.gmra.mrb[0].mxu0 %v1142
        %v1352 = vpop.f32.mrb[0].mxu0
        %v1353 = vadd.f32 %v1138, %v1352
        %v1354 = vpop.f32.mrb[0].mxu0
        %v1355 = vadd.f32 %v1138, %v1354
        %1356 = vdwg.mxu0
        %1357 = vmatprep.subr.mxu0 %v1122
        %1358 = vmatpush1.msra.mxu0 %v1121
        %1359 = vmatprep.subr.mxu0 %v1130
        %1360 = vmatpush1.msra.mxu0 %v1129
        %1361 = vmatprep.subr.mxu0 0.0
        %1362 = vmatpush1.msra.mxu0 0.0
        %1363 = vmatprep.subr.mxu0 0.0
        %1364 = vmatpush1.msra.mxu0 0.0
        %1365 = vmatprep.subr.mxu0 0.0
        %1366 = vmatpush1.msra.mxu0 0.0
        %1367 = vmatprep.subr.mxu0 0.0
        %1368 = vmatpush1.msra.mxu0 0.0
        %1369 = vmatprep.subr.mxu0 0.0
        %1370 = vmatpush1.msra.mxu0 0.0
        %1371 = vmatprep.subr.mxu0 0.0
        %1372 = vmatpush1.msra.mxu0 0.0
        %1373 = vmatprep.subr.mxu0 0.0
        %1374 = vmatpush1.msra.mxu0 0.0
        %1375 = vmatprep.subr.mxu0 0.0
        %1376 = vmatpush1.msra.mxu0 0.0
        %1377 = vmatprep.subr.mxu0 0.0
        %1378 = vmatpush1.msra.mxu0 0.0
        %1379 = vmatprep.subr.mxu0 0.0
        %1380 = vmatpush1.msra.mxu0 0.0
        %1381 = vmatprep.subr.mxu0 0.0
        %1382 = vmatpush1.msra.mxu0 0.0
        %1383 = vmatprep.subr.mxu0 0.0
        %1384 = vmatpush1.msra.mxu0 0.0
        %1385 = vmatprep.subr.mxu0 0.0
        %1386 = vmatpush1.msra.mxu0 0.0
        %1387 = vmatprep.subr.mxu0 0.0
        %1388 = vmatpush1.msra.mxu0 0.0
        %1389 = vmatprep.subr.mxu0 0.0
        %1390 = vmatpush1.msra.mxu0 0.0
        %1391 = vmatprep.subr.mxu0 0.0
        %1392 = vmatpush1.msra.mxu0 0.0
        %1393 = vmatprep.subr.mxu0 0.0
        %1394 = vmatpush1.msra.mxu0 0.0
        %1395 = vmatprep.subr.mxu0 0.0
        %1396 = vmatpush1.msra.mxu0 0.0
        %1397 = vmatprep.subr.mxu0 0.0
        %1398 = vmatpush1.msra.mxu0 0.0
        %1399 = vmatprep.subr.mxu0 0.0
        %1400 = vmatpush1.msra.mxu0 0.0
        %1401 = vmatprep.subr.mxu0 0.0
        %1402 = vmatpush1.msra.mxu0 0.0
        %1403 = vmatprep.subr.mxu0 0.0
        %1404 = vmatpush1.msra.mxu0 0.0
        %1405 = vmatprep.subr.mxu0 0.0
        %1406 = vmatpush1.msra.mxu0 0.0
        %1407 = vmatprep.subr.mxu0 0.0
        %1408 = vmatpush1.msra.mxu0 0.0
        %1409 = vmatprep.subr.mxu0 0.0
        %1410 = vmatpush1.msra.mxu0 0.0
        %1411 = vmatprep.subr.mxu0 0.0
        %1412 = vmatpush1.msra.mxu0 0.0
        %1413 = vmatprep.subr.mxu0 0.0
        %1414 = vmatpush1.msra.mxu0 0.0
        %1415 = vmatprep.subr.mxu0 0.0
        %1416 = vmatpush1.msra.mxu0 0.0
        %1417 = vmatprep.subr.mxu0 0.0
        %1418 = vmatpush1.msra.mxu0 0.0
        %1419 = vmatprep.subr.mxu0 0.0
        %1420 = vmatpush1.msra.mxu0 0.0
        %1421 = vmatprep.mubr.f32.mxu0 0.0
        %1422 = vmatmul.mubr.f32.gmra.mrb[0].mxu0 %v1142
        %v1423 = vpop.f32.mrb[0].mxu0
        %v1424 = vadd.f32 %v1138, %v1423
        %v1425 = vpop.f32.mrb[0].mxu0
        %v1426 = vadd.f32 %v1138, %v1425
        %1427 = vdwg.mxu0
        %v1428 = vmax.f32 %v1211, 0.0
        %v1429 = vmax.f32 %v1213, 0.0
        %v1430 = vmax.f32 %v1282, 0.0
        %v1431 = vmax.f32 %v1284, 0.0
        %v1432 = vmax.f32 %v1353, 0.0
        %v1433 = vmax.f32 %v1355, 0.0
        %v1434 = vmax.f32 %v1424, 0.0
        %v1435 = vmax.f32 %v1426, 0.0
        %s1436 = scalar_lea.vmem %s2, 192
        %v1437 = vld [vmem:[%s1436] sm:$0xff]
        %s1438 = scalar_lea.vmem %s3, 192
        %v1439 = vld [vmem:[%s1438] sm:$0x1]
        %1441 = vset.pattern.permute.xlu0 0
        %1442 = vperm.xlu0 %1441, %v1437
        %v1443 = vpop.permute.xlu0 %1442
        %v1445 = vmul.f32 %v1443, %v1428
        %v1446 = vmul.f32 %v1443, %v1429
        %v1447 = vmul.f32 %v1443, %v1430
        %v1448 = vmul.f32 %v1443, %v1431
        %v1449 = vmul.f32 %v1443, %v1432
        %v1450 = vmul.f32 %v1443, %v1433
        %v1451 = vmul.f32 %v1443, %v1434
        %v1452 = vmul.f32 %v1443, %v1435
        %v1453 = vrot.slane %v1445, 4
        %v1454 = vadd.f32 %v1445, %v1453
        %v1455 = vrot.slane %v1454, 2
        %v1456 = vadd.f32 %v1454, %v1455
        %v1457 = vrot.slane %v1456, 1
        %v1458 = vadd.f32 %v1456, %v1457
        %v1459 = vrot.slane %v1446, 4
        %v1460 = vadd.f32 %v1446, %v1459
        %v1461 = vrot.slane %v1460, 2
        %v1462 = vadd.f32 %v1460, %v1461
        %v1463 = vrot.slane %v1462, 1
        %v1464 = vadd.f32 %v1462, %v1463
        %v1465 = vrot.slane %v1447, 4
        %v1466 = vadd.f32 %v1447, %v1465
        %v1467 = vrot.slane %v1466, 2
        %v1468 = vadd.f32 %v1466, %v1467
        %v1469 = vrot.slane %v1468, 1
        %v1470 = vadd.f32 %v1468, %v1469
        %v1471 = vrot.slane %v1448, 4
        %v1472 = vadd.f32 %v1448, %v1471
        %v1473 = vrot.slane %v1472, 2
        %v1474 = vadd.f32 %v1472, %v1473
        %v1475 = vrot.slane %v1474, 1
        %v1476 = vadd.f32 %v1474, %v1475
        %v1477 = vrot.slane %v1449, 4
        %v1478 = vadd.f32 %v1449, %v1477
        %v1479 = vrot.slane %v1478, 2
        %v1480 = vadd.f32 %v1478, %v1479
        %v1481 = vrot.slane %v1480, 1
        %v1482 = vadd.f32 %v1480, %v1481
        %v1483 = vrot.slane %v1450, 4
        %v1484 = vadd.f32 %v1450, %v1483
        %v1485 = vrot.slane %v1484, 2
        %v1486 = vadd.f32 %v1484, %v1485
        %v1487 = vrot.slane %v1486, 1
        %v1488 = vadd.f32 %v1486, %v1487
        %v1489 = vrot.slane %v1451, 4
        %v1490 = vadd.f32 %v1451, %v1489
        %v1491 = vrot.slane %v1490, 2
        %v1492 = vadd.f32 %v1490, %v1491
        %v1493 = vrot.slane %v1492, 1
        %v1494 = vadd.f32 %v1492, %v1493
        %v1495 = vrot.slane %v1452, 4
        %v1496 = vadd.f32 %v1452, %v1495
        %v1497 = vrot.slane %v1496, 2
        %v1498 = vadd.f32 %v1496, %v1497
        %v1499 = vrot.slane %v1498, 1
        %v1500 = vadd.f32 %v1498, %v1499
        %1502 = vset.pattern.permute.xlu0 0
        %1503 = vperm.xlu0 %1502, %v1439
        %v1504 = vpop.permute.xlu0 %1503
        %v1506 = vadd.f32 %v1458, %v1504
        %v1507 = vadd.f32 %v1464, %v1504
        %v1508 = vadd.f32 %v1470, %v1504
        %v1509 = vadd.f32 %v1476, %v1504
        %v1510 = vadd.f32 %v1482, %v1504
        %v1511 = vadd.f32 %v1488, %v1504
        %v1512 = vadd.f32 %v1494, %v1504
        %v1513 = vadd.f32 %v1500, %v1504
        %v1522 = vcombine.low %v1506, %v1507
        %v1523 = vcombine.low %v1508, %v1509
        %v1524 = vcombine.low %v1510, %v1511
        %v1525 = vcombine.low %v1512, %v1513
        %v1527 = vunpack.c.l.s4 1966171168
        %v1528 = vunpack.c.0.s8 %v1527
        %v1529 = vlaneseq
        %v1530 = vshrl.u32 %v1529, 7
        %v1531 = vsub.s32 %v1528, %v1530
        %v1532 = vrot.slane %v1522, %v1531
        %v1534 = vunpack.c.l.s4 1966171168
        %v1535 = vunpack.c.0.s8 %v1534
        %v1536 = vlaneseq
        %v1537 = vshrl.u32 %v1536, 7
        %v1538 = vsub.s32 %v1535, %v1537
        %v1539 = vrot.slane %v1523, %v1538
        %v1541 = vunpack.c.l.s4 1966171168
        %v1542 = vunpack.c.0.s8 %v1541
        %v1543 = vlaneseq
        %v1544 = vshrl.u32 %v1543, 7
        %v1545 = vsub.s32 %v1542, %v1544
        %v1546 = vrot.slane %v1524, %v1545
        %v1548 = vunpack.c.l.s4 1966171168
        %v1549 = vunpack.c.0.s8 %v1548
        %v1550 = vlaneseq
        %v1551 = vshrl.u32 %v1550, 7
        %v1552 = vsub.s32 %v1549, %v1551
        %v1553 = vrot.slane %v1525, %v1552
        %v1554 = vcombine.low %v1532, %v1539
        %v1555 = vcombine.low %v1546, %v1553
        %v1557 = vunpack.c.l.s4 1966171168
        %v1558 = vunpack.c.0.s8 %v1557
        %v1559 = vlaneseq
        %v1560 = vshrl.u32 %v1559, 7
        %v1561 = vsub.s32 %v1558, %v1560
        %v1562 = vrot.slane %v1554, %v1561
        %v1564 = vunpack.c.l.s4 1966171168
        %v1565 = vunpack.c.0.s8 %v1564
        %v1566 = vlaneseq
        %v1567 = vshrl.u32 %v1566, 7
        %v1568 = vsub.s32 %v1565, %v1567
        %v1569 = vrot.slane %v1555, %v1568
        %v1570 = vcombine.low %v1562, %v1569
        %1572 = vst [vmem:[%s251] sm:$0xff] %v1570
        %s1573 = sand.u32 %s126, 1
        %s1574 = scalar_lea.sflag [#allocation4], %s1573
        %s1575 = sand.u32 %s126, 1
        %s1576 = smul.addr %s1575, 8
        %s1577 = scalar_lea.vmem [#allocation7], %s1576
        // Predicated region
        $region45: #{tpu_custom_call.1} parent=35 // pred_check
          %p1578 = pneg %p136
        $region46: #{tpu_custom_call.1} parent=35 // pred_check_branch
          %1580 = sbr.rel (%p1578) target = $region48
        $region47: #{tpu_custom_call.1} parent=35 // pred_region
          %s1582 = ssub.s32 128, 128
          %1583 = vsyncadd %s1574, %s1582
          %s1584 = smul.addr %s24, 8
          %s1585 = smul.addr %s1584, 16
          %s1586 = scalar_lea.hbm %s4, %s1585
          %s1588 = sshll.u32 %s1577, 4
          %s1589 = int_to_ptr.vmem [resolvable:$true] %s1588
          %1591 = dma.vmem_to_hbm [thread:$0]  %s1589, 128, %s1586, %s1574
        $region48: #{tpu_custom_call.1} parent=35 // pred_fallthru
          _
      $region36: #{tpu_custom_call.1} parent=5 // pred_fallthru
        _
      %p1592 = scmp.le.s32.totalorder 2, %s19
      // Predicated region
      $region49: #{tpu_custom_call.1} parent=5 // pred_check
        %p1593 = pneg %p1592
      $region50: #{tpu_custom_call.1} parent=5 // pred_check_branch
        %1595 = sbr.rel (%p1593) target = $region52
      $region51: #{tpu_custom_call.1} parent=5 // pred_region
        %s1596 = ssub.s32 %s19, 2
        // Predicated region
        $region53: #{tpu_custom_call.1} parent=51 // pred_check
          %p1597 = pneg %p142
        $region54: #{tpu_custom_call.1} parent=51 // pred_check_branch
          %1599 = sbr.rel (%p1597) target = $region56
        $region55: #{tpu_custom_call.1} parent=51 // pred_region
          %s1600 = sand.u32 %s127, 1
          %s1601 = scalar_lea.sflag [#allocation4], %s1600
          %s1602 = sand.u32 %s127, 1
          %s1603 = smul.addr %s1602, 8
          %s1604 = scalar_lea.vmem [#allocation7], %s1603
          %1605 = dma.done %s1601, 128
        $region56: #{tpu_custom_call.1} parent=51 // pred_fallthru
          _
      $region52: #{tpu_custom_call.1} parent=5 // pred_fallthru
        _
    $region6: #{tpu_custom_call.1} parent=1 // loop_footer
      %s23 = sadd.s32 1, %s19
    $region7: #{tpu_custom_call.1} parent=1 // loop_footer_branch
      %18 = sbr.rel target = $region3
    $region8: #{tpu_custom_call.1} parent=1 // loop_exit
      _
    %1606 = vsyncpa [#allocation3], 1
    %s1607 = scalar_lea.sflag [#allocation3], 1
    %1608 = vsyncpa %s1607, 1
    %1609 = vsyncpa [#allocation6], 1
    %s1610 = scalar_lea.sflag [#allocation6], 1
    %1611 = vsyncpa %s1610, 1
    %1612 = vsyncpa [#allocation4], 1
    %s1613 = scalar_lea.sflag [#allocation4], 1
    %1614 = vsyncpa %s1613, 1

</llo_original>
